<compile_context>
chip_gen: v7x
topology: tpu7x:2x2x1
jax: 0.10.0
libtpu: 0.0.40
codegen_flags: <defaults>
</compile_context>

<pallas_src>
import functools

import jax
import jax.numpy as jnp
from jax.experimental import pallas as pl
from jax.experimental.pallas import tpu as pltpu

_EPS = 1e-5  # torch.nn.LayerNorm default eps


def _max_tree(parts):
    """Balanced pairwise max tree (log-depth critical path)."""
    while len(parts) > 1:
        nxt = [jnp.maximum(parts[i], parts[i + 1])
               for i in range(0, len(parts) - 1, 2)]
        if len(parts) % 2:
            nxt.append(parts[-1])
        parts = nxt
    return parts[0]


def _pool_rows(src_ref, n_out, w):
    """Max over groups of `w` consecutive rows of a 2-D ref -> (n_out, D).

    Implemented as `w` strided sublane reads (stride == w) plus a balanced
    pairwise max tree, all in the source dtype.
    """
    if w == 1:
        return src_ref[pl.ds(0, n_out), :]
    views = [src_ref[pl.ds(k, n_out, stride=w), :] for k in range(w)]
    return _max_tree(views)


def _kernel(x_ref, gamma_ref, beta_ref, o0_ref, o1_ref, o2_ref, o3_ref,
            buf1_ref, buf2_ref, *, windows, clens):
    # Affine params: cast once; (1, D) broadcasts over rows.
    gamma_f = gamma_ref[...].astype(jnp.float32)
    beta_f = beta_ref[...].astype(jnp.float32)

    def layer_norm(v):  # (n, D) -> (n, D) f32, normalized over lanes (D)
        v = v.astype(jnp.float32)
        mean = jnp.mean(v, axis=-1, keepdims=True)
        cen = v - mean
        var = jnp.mean(cen * cen, axis=-1, keepdims=True)
        return cen * jax.lax.rsqrt(var + _EPS) * gamma_f + beta_f

    # ---- Level 0: the raw chunk (one full-block, lane-dense store). ----
    o0_ref[...] = layer_norm(x_ref[...]).astype(o0_ref.dtype)

    # ---- Level 1: pool the input chunk; keep pooled rows in a small ----
    # ---- input-dtype scratch so level 2 pools it, not the full input. ----
    p1 = _pool_rows(x_ref, clens[1], windows[0])
    buf1_ref[...] = p1
    o1_ref[...] = layer_norm(p1).astype(o1_ref.dtype)

    # ---- Level 2: pool level 1. ----
    p2 = _pool_rows(buf1_ref, clens[2], windows[1])
    buf2_ref[...] = p2
    o2_ref[...] = layer_norm(p2).astype(o2_ref.dtype)

    # ---- Level 3: pool level 2. ----
    p3 = _pool_rows(buf2_ref, clens[3], windows[2])
    o3_ref[...] = layer_norm(p3).astype(o3_ref.dtype)


def _choose_chunk(L, W, D, itemsize, *, target_block_bytes, max_chunk_rows):
    """Pick an L-chunk: a multiple of 8*W (every per-level block stays
    sublane-aligned and all floor divisions exact) that divides L and keeps the
    input block under the byte target.  Returns L when no such chunk exists."""
    base = 8 * W
    if L % base != 0:
        return L
    limit = target_block_bytes // max(1, D * itemsize)
    if max_chunk_rows is not None:
        limit = min(limit, max_chunk_rows)
    limit = min(max(limit, base), L)
    best = base
    c = base
    while c <= limit:
        if L % c == 0:
            best = c
        c += base
    return best


def max_pooling_construct(x, gamma, beta, window_size, *,
                          max_chunk_rows=None, target_block_bytes=2 << 20):
    """x: (B, L, D); gamma/beta: (D,) LayerNorm params.

    Matches PyTorch MaxPool1d (kernel == stride, no padding): trailing rows of
    a level that don't fill a window are dropped.
    """
    if isinstance(window_size, (list, tuple)):
        windows = tuple(int(w) for w in window_size)
    else:
        windows = (int(window_size),) * 3
    assert len(windows) == 3

    B, L, D = x.shape
    W = windows[0] * windows[1] * windows[2]

    # Full (floor) level lengths, applied sequentially like the ModuleList.
    full_lens = [L]
    cur = L
    for w in windows:
        cur //= w
        full_lens.append(cur)
    assert all(l >= 1 for l in full_lens), "sequence too short for the pooling pyramid"

    chunk = _choose_chunk(L, W, D, x.dtype.itemsize,
                          target_block_bytes=target_block_bytes,
                          max_chunk_rows=max_chunk_rows)
    if chunk < L:
        num_chunks = L // chunk
        clens = (chunk, chunk // windows[0],
                 chunk // (windows[0] * windows[1]), chunk // W)
    else:
        chunk = L
        num_chunks = 1
        clens = tuple(full_lens)

    kernel = functools.partial(_kernel, windows=windows, clens=clens)

    # HBM-bandwidth-bound: read L*D, write ~1.33*L*D per batch element.
    itemsize = x.dtype.itemsize
    total = sum(full_lens)
    pool_rows = sum(full_lens[i + 1] * (windows[i] - 1) for i in range(3))
    cost = pl.CostEstimate(
        flops=int(B * D * (pool_rows + 7 * total)),
        transcendentals=int(B * total),
        bytes_accessed=int(B * (L + total) * D * itemsize + 2 * D * 4),
    )

    in_specs = [
        pl.BlockSpec((None, chunk, D), lambda b, c: (b, c, 0)),
        pl.BlockSpec((1, D), lambda b, c: (0, 0)),
        pl.BlockSpec((1, D), lambda b, c: (0, 0)),
    ]
    out_shapes = tuple(jax.ShapeDtypeStruct((B, full_lens[l], D), x.dtype)
                       for l in range(4))
    out_specs = tuple(pl.BlockSpec((None, clens[l], D), lambda b, c: (b, c, 0))
                      for l in range(4))
    scratch_shapes = [pltpu.VMEM((clens[1], D), x.dtype),
                      pltpu.VMEM((clens[2], D), x.dtype)]

    outs = pl.pallas_call(
        kernel,
        out_shape=out_shapes,
        grid=(B, num_chunks),
        in_specs=in_specs,
        out_specs=out_specs,
        scratch_shapes=scratch_shapes,
        compiler_params=pltpu.CompilerParams(
            dimension_semantics=("parallel", "parallel")),
        cost_estimate=cost,
    )(x, gamma.reshape(1, D), beta.reshape(1, D))

    # torch.cat(..., dim=time): chunk blocks already land at the right rows of
    # each level; the final cross-level concat is a cheap XLA copy.
    return jnp.concatenate(outs, axis=1)


def reference(x, gamma, beta, windows):
    """Pure-JAX mirror of the PyTorch forward for validation."""
    outs = [x]
    cur = x
    for w in windows:
        B, Lc, D = cur.shape
        lo = Lc // w
        cur = jnp.max(cur[:, :lo * w, :].reshape(B, lo, w, D), axis=2)
        outs.append(cur)
    cat = jnp.concatenate(outs, axis=1)
    mean = jnp.mean(cat, axis=-1, keepdims=True)
    var = jnp.mean((cat - mean) ** 2, axis=-1, keepdims=True)
    return (cat - mean) / jnp.sqrt(var + _EPS) * gamma + beta


if __name__ == "__main__":
    key = jax.random.PRNGKey(0)
    k1, k2, k3, k4 = jax.random.split(key, 4)

    # Main test: f32, chunked path.  L=1024, CHUNK=512 -> grid (2, 2), levels
    # per chunk 512/128/32/8 rows (all sublane-aligned), D=128 lane-dense.
    B, L, D = 2, 1024, 128
    window_size = 4

    x = jax.random.normal(k1, (B, L, D), dtype=jnp.float32)
    gamma = 1.0 + 0.1 * jax.random.normal(k2, (D,), dtype=jnp.float32)
    beta = 0.1 * jax.random.normal(k3, (D,), dtype=jnp.float32)

    out = max_pooling_construct(x, gamma, beta, window_size, max_chunk_rows=512)
    out = jax.block_until_ready(out)

    ref = reference(x, gamma, beta, (window_size,) * 3)
    assert out.shape == ref.shape, (out.shape, ref.shape)
    err = float(jnp.max(jnp.abs(out - ref)))
    assert jnp.allclose(out, ref, rtol=1e-4, atol=1e-4), err

    # Secondary test: bf16 input, L not divisible by the pyramid (falls back to
    # one whole-sequence block with floor-length levels and dropped tails).
    B2, L2 = 1, 70
    xb = jax.random.normal(k4, (B2, L2, D), dtype=jnp.bfloat16)
    out2 = max_pooling_construct(xb, gamma, beta, [4, 4, 4])
    out2 = jax.block_until_ready(out2)
    ref2 = reference(xb.astype(jnp.float32), gamma, beta, (4, 4, 4))
    assert out2.shape == ref2.shape, (out2.shape, ref2.shape)
    err2 = float(jnp.max(jnp.abs(out2.astype(jnp.float32) - ref2)))
    assert jnp.allclose(out2.astype(jnp.float32), ref2, rtol=2e-2, atol=2e-2), err2

    print("KERNEL_OK")
</pallas_src>

<mosaic_0001>
module attributes {stable_mosaic.version = 11 : i64} {
  func.func @_kernel(%arg0: i32, %arg1: i32, %arg2: memref<1x512x128xf32, #tpu.memory_space<vmem>>, %arg3: memref<1x128xf32, #tpu.memory_space<vmem>>, %arg4: memref<1x128xf32, #tpu.memory_space<vmem>>, %arg5: memref<1x512x128xf32, #tpu.memory_space<vmem>>, %arg6: memref<1x128x128xf32, #tpu.memory_space<vmem>>, %arg7: memref<1x32x128xf32, #tpu.memory_space<vmem>>, %arg8: memref<1x8x128xf32, #tpu.memory_space<vmem>>, %arg9: memref<128x128xf32, #tpu.memory_space<vmem>>, %arg10: memref<32x128xf32, #tpu.memory_space<vmem>>) attributes {dimension_semantics = [#tpu.dimension_semantics<parallel>, #tpu.dimension_semantics<parallel>], iteration_bounds = array<i64: 2, 2>, scalar_prefetch = 0 : i64, scratch_operands = 2 : i64, tpu.core_type = #tpu.core_type<tc>, window_params = [{transform_indices = @transform_0, window_bounds = array<i64: 1, 512, 128>}, {pipeline_mode = #tpu.pipeline_mode<synchronous>, transform_indices = @transform_1, window_bounds = array<i64: 1, 128>}, {pipeline_mode = #tpu.pipeline_mode<synchronous>, transform_indices = @transform_2, window_bounds = array<i64: 1, 128>}, {transform_indices = @transform_3, window_bounds = array<i64: 1, 512, 128>}, {transform_indices = @transform_4, window_bounds = array<i64: 1, 128, 128>}, {transform_indices = @transform_5, window_bounds = array<i64: 1, 32, 128>}, {transform_indices = @transform_6, window_bounds = array<i64: 1, 8, 128>}]} {
    %c0 = arith.constant 0 : index
    %c0_0 = arith.constant 0 : index
    %0 = vector.load %arg3[%c0, %c0_0] : memref<1x128xf32, #tpu.memory_space<vmem>>, vector<1x128xf32>
    %c0_1 = arith.constant 0 : index
    %c0_2 = arith.constant 0 : index
    %1 = vector.load %arg4[%c0_1, %c0_2] : memref<1x128xf32, #tpu.memory_space<vmem>>, vector<1x128xf32>
    %c0_3 = arith.constant 0 : index
    %c0_4 = arith.constant 0 : index
    %c0_5 = arith.constant 0 : index
    %2 = vector.load %arg2[%c0_3, %c0_4, %c0_5] : memref<1x512x128xf32, #tpu.memory_space<vmem>>, vector<1x512x128xf32>
    %3 = vector.shape_cast %2 : vector<1x512x128xf32> to vector<512x128xf32>
    %cst = arith.constant dense<0.000000e+00> : vector<512xf32>
    %4 = vector.multi_reduction <add>, %3, %cst [1] : vector<512x128xf32> to vector<512xf32>
    %5 = vector.shape_cast %4 : vector<512xf32> to vector<512x1xf32>
    %cst_6 = arith.constant 1.280000e+02 : f32
    %6 = vector.broadcast %cst_6 : f32 to vector<512x1xf32>
    %7 = arith.divf %5, %6 : vector<512x1xf32>
    %8 = vector.broadcast %7 : vector<512x1xf32> to vector<512x128xf32>
    %9 = arith.subf %3, %8 : vector<512x128xf32>
    %10 = arith.mulf %9, %9 : vector<512x128xf32>
    %cst_7 = arith.constant dense<0.000000e+00> : vector<512xf32>
    %11 = vector.multi_reduction <add>, %10, %cst_7 [1] : vector<512x128xf32> to vector<512xf32>
    %12 = vector.shape_cast %11 : vector<512xf32> to vector<512x1xf32>
    %cst_8 = arith.constant 1.280000e+02 : f32
    %13 = vector.broadcast %cst_8 : f32 to vector<512x1xf32>
    %14 = arith.divf %12, %13 : vector<512x1xf32>
    %cst_9 = arith.constant 9.99999974E-6 : f32
    %15 = vector.broadcast %cst_9 : f32 to vector<512x1xf32>
    %16 = arith.addf %14, %15 : vector<512x1xf32>
    %17 = math.rsqrt %16 : vector<512x1xf32>
    %18 = vector.broadcast %17 : vector<512x1xf32> to vector<512x128xf32>
    %19 = arith.mulf %9, %18 : vector<512x128xf32>
    %20 = vector.broadcast %0 : vector<1x128xf32> to vector<512x128xf32>
    %21 = arith.mulf %19, %20 : vector<512x128xf32>
    %22 = vector.broadcast %1 : vector<1x128xf32> to vector<512x128xf32>
    %23 = arith.addf %21, %22 : vector<512x128xf32>
    %c0_10 = arith.constant 0 : index
    %c0_11 = arith.constant 0 : index
    %c0_12 = arith.constant 0 : index
    %24 = vector.load %arg5[%c0_10, %c0_11, %c0_12] : memref<1x512x128xf32, #tpu.memory_space<vmem>>, vector<1x512x128xf32>
    %25 = vector.shape_cast %24 : vector<1x512x128xf32> to vector<512x128xf32>
    %26 = vector.shape_cast %23 : vector<512x128xf32> to vector<1x512x128xf32>
    tpu.vector_store %arg5[%c0_10, %c0_11, %c0_12], %26 {strides = array<i32>} : memref<1x512x128xf32, #tpu.memory_space<vmem>>, vector<1x512x128xf32>,
    %c0_13 = arith.constant 0 : index
    %c0_14 = arith.constant 0 : index
    %c0_15 = arith.constant 0 : index
    %27 = tpu.strided_load %arg2[%c0_13, %c0_14, %c0_15] {strides = array<i32: 1, 4, 1>} : memref<1x512x128xf32, #tpu.memory_space<vmem>>, vector<1x128x128xf32>
    %28 = vector.shape_cast %27 : vector<1x128x128xf32> to vector<128x128xf32>
    %c0_16 = arith.constant 0 : index
    %c1 = arith.constant 1 : index
    %c0_17 = arith.constant 0 : index
    %29 = tpu.strided_load %arg2[%c0_16, %c1, %c0_17] {strides = array<i32: 1, 4, 1>} : memref<1x512x128xf32, #tpu.memory_space<vmem>>, vector<1x128x128xf32>
    %30 = vector.shape_cast %29 : vector<1x128x128xf32> to vector<128x128xf32>
    %c0_18 = arith.constant 0 : index
    %c2 = arith.constant 2 : index
    %c0_19 = arith.constant 0 : index
    %31 = tpu.strided_load %arg2[%c0_18, %c2, %c0_19] {strides = array<i32: 1, 4, 1>} : memref<1x512x128xf32, #tpu.memory_space<vmem>>, vector<1x128x128xf32>
    %32 = vector.shape_cast %31 : vector<1x128x128xf32> to vector<128x128xf32>
    %c0_20 = arith.constant 0 : index
    %c3 = arith.constant 3 : index
    %c0_21 = arith.constant 0 : index
    %33 = tpu.strided_load %arg2[%c0_20, %c3, %c0_21] {strides = array<i32: 1, 4, 1>} : memref<1x512x128xf32, #tpu.memory_space<vmem>>, vector<1x128x128xf32>
    %34 = vector.shape_cast %33 : vector<1x128x128xf32> to vector<128x128xf32>
    %35 = arith.maximumf %28, %30 : vector<128x128xf32>
    %36 = arith.maximumf %32, %34 : vector<128x128xf32>
    %37 = arith.maximumf %35, %36 : vector<128x128xf32>
    %c0_22 = arith.constant 0 : index
    %c0_23 = arith.constant 0 : index
    %38 = vector.load %arg9[%c0_22, %c0_23] : memref<128x128xf32, #tpu.memory_space<vmem>>, vector<128x128xf32>
    tpu.vector_store %arg9[%c0_22, %c0_23], %37 {strides = array<i32>} : memref<128x128xf32, #tpu.memory_space<vmem>>, vector<128x128xf32>,
    %cst_24 = arith.constant dense<0.000000e+00> : vector<128xf32>
    %39 = vector.multi_reduction <add>, %37, %cst_24 [1] : vector<128x128xf32> to vector<128xf32>
    %40 = vector.shape_cast %39 : vector<128xf32> to vector<128x1xf32>
    %cst_25 = arith.constant 1.280000e+02 : f32
    %41 = vector.broadcast %cst_25 : f32 to vector<128x1xf32>
    %42 = arith.divf %40, %41 : vector<128x1xf32>
    %43 = vector.broadcast %42 : vector<128x1xf32> to vector<128x128xf32>
    %44 = arith.subf %37, %43 : vector<128x128xf32>
    %45 = arith.mulf %44, %44 : vector<128x128xf32>
    %cst_26 = arith.constant dense<0.000000e+00> : vector<128xf32>
    %46 = vector.multi_reduction <add>, %45, %cst_26 [1] : vector<128x128xf32> to vector<128xf32>
    %47 = vector.shape_cast %46 : vector<128xf32> to vector<128x1xf32>
    %cst_27 = arith.constant 1.280000e+02 : f32
    %48 = vector.broadcast %cst_27 : f32 to vector<128x1xf32>
    %49 = arith.divf %47, %48 : vector<128x1xf32>
    %cst_28 = arith.constant 9.99999974E-6 : f32
    %50 = vector.broadcast %cst_28 : f32 to vector<128x1xf32>
    %51 = arith.addf %49, %50 : vector<128x1xf32>
    %52 = math.rsqrt %51 : vector<128x1xf32>
    %53 = vector.broadcast %52 : vector<128x1xf32> to vector<128x128xf32>
    %54 = arith.mulf %44, %53 : vector<128x128xf32>
    %55 = vector.broadcast %0 : vector<1x128xf32> to vector<128x128xf32>
    %56 = arith.mulf %54, %55 : vector<128x128xf32>
    %57 = vector.broadcast %1 : vector<1x128xf32> to vector<128x128xf32>
    %58 = arith.addf %56, %57 : vector<128x128xf32>
    %c0_29 = arith.constant 0 : index
    %c0_30 = arith.constant 0 : index
    %c0_31 = arith.constant 0 : index
    %59 = vector.load %arg6[%c0_29, %c0_30, %c0_31] : memref<1x128x128xf32, #tpu.memory_space<vmem>>, vector<1x128x128xf32>
    %60 = vector.shape_cast %59 : vector<1x128x128xf32> to vector<128x128xf32>
    %61 = vector.shape_cast %58 : vector<128x128xf32> to vector<1x128x128xf32>
    tpu.vector_store %arg6[%c0_29, %c0_30, %c0_31], %61 {strides = array<i32>} : memref<1x128x128xf32, #tpu.memory_space<vmem>>, vector<1x128x128xf32>,
    %c0_32 = arith.constant 0 : index
    %c0_33 = arith.constant 0 : index
    %62 = tpu.strided_load %arg9[%c0_32, %c0_33] {strides = array<i32: 4, 1>} : memref<128x128xf32, #tpu.memory_space<vmem>>, vector<32x128xf32>
    %c1_34 = arith.constant 1 : index
    %c0_35 = arith.constant 0 : index
    %63 = tpu.strided_load %arg9[%c1_34, %c0_35] {strides = array<i32: 4, 1>} : memref<128x128xf32, #tpu.memory_space<vmem>>, vector<32x128xf32>
    %c2_36 = arith.constant 2 : index
    %c0_37 = arith.constant 0 : index
    %64 = tpu.strided_load %arg9[%c2_36, %c0_37] {strides = array<i32: 4, 1>} : memref<128x128xf32, #tpu.memory_space<vmem>>, vector<32x128xf32>
    %c3_38 = arith.constant 3 : index
    %c0_39 = arith.constant 0 : index
    %65 = tpu.strided_load %arg9[%c3_38, %c0_39] {strides = array<i32: 4, 1>} : memref<128x128xf32, #tpu.memory_space<vmem>>, vector<32x128xf32>
    %66 = arith.maximumf %62, %63 : vector<32x128xf32>
    %67 = arith.maximumf %64, %65 : vector<32x128xf32>
    %68 = arith.maximumf %66, %67 : vector<32x128xf32>
    %c0_40 = arith.constant 0 : index
    %c0_41 = arith.constant 0 : index
    %69 = vector.load %arg10[%c0_40, %c0_41] : memref<32x128xf32, #tpu.memory_space<vmem>>, vector<32x128xf32>
    tpu.vector_store %arg10[%c0_40, %c0_41], %68 {strides = array<i32>} : memref<32x128xf32, #tpu.memory_space<vmem>>, vector<32x128xf32>,
    %cst_42 = arith.constant dense<0.000000e+00> : vector<32xf32>
    %70 = vector.multi_reduction <add>, %68, %cst_42 [1] : vector<32x128xf32> to vector<32xf32>
    %71 = vector.shape_cast %70 : vector<32xf32> to vector<32x1xf32>
    %cst_43 = arith.constant 1.280000e+02 : f32
    %72 = vector.broadcast %cst_43 : f32 to vector<32x1xf32>
    %73 = arith.divf %71, %72 : vector<32x1xf32>
    %74 = vector.broadcast %73 : vector<32x1xf32> to vector<32x128xf32>
    %75 = arith.subf %68, %74 : vector<32x128xf32>
    %76 = arith.mulf %75, %75 : vector<32x128xf32>
    %cst_44 = arith.constant dense<0.000000e+00> : vector<32xf32>
    %77 = vector.multi_reduction <add>, %76, %cst_44 [1] : vector<32x128xf32> to vector<32xf32>
    %78 = vector.shape_cast %77 : vector<32xf32> to vector<32x1xf32>
    %cst_45 = arith.constant 1.280000e+02 : f32
    %79 = vector.broadcast %cst_45 : f32 to vector<32x1xf32>
    %80 = arith.divf %78, %79 : vector<32x1xf32>
    %cst_46 = arith.constant 9.99999974E-6 : f32
    %81 = vector.broadcast %cst_46 : f32 to vector<32x1xf32>
    %82 = arith.addf %80, %81 : vector<32x1xf32>
    %83 = math.rsqrt %82 : vector<32x1xf32>
    %84 = vector.broadcast %83 : vector<32x1xf32> to vector<32x128xf32>
    %85 = arith.mulf %75, %84 : vector<32x128xf32>
    %86 = vector.broadcast %0 : vector<1x128xf32> to vector<32x128xf32>
    %87 = arith.mulf %85, %86 : vector<32x128xf32>
    %88 = vector.broadcast %1 : vector<1x128xf32> to vector<32x128xf32>
    %89 = arith.addf %87, %88 : vector<32x128xf32>
    %c0_47 = arith.constant 0 : index
    %c0_48 = arith.constant 0 : index
    %c0_49 = arith.constant 0 : index
    %90 = vector.load %arg7[%c0_47, %c0_48, %c0_49] : memref<1x32x128xf32, #tpu.memory_space<vmem>>, vector<1x32x128xf32>
    %91 = vector.shape_cast %90 : vector<1x32x128xf32> to vector<32x128xf32>
    %92 = vector.shape_cast %89 : vector<32x128xf32> to vector<1x32x128xf32>
    tpu.vector_store %arg7[%c0_47, %c0_48, %c0_49], %92 {strides = array<i32>} : memref<1x32x128xf32, #tpu.memory_space<vmem>>, vector<1x32x128xf32>,
    %c0_50 = arith.constant 0 : index
    %c0_51 = arith.constant 0 : index
    %93 = tpu.strided_load %arg10[%c0_50, %c0_51] {strides = array<i32: 4, 1>} : memref<32x128xf32, #tpu.memory_space<vmem>>, vector<8x128xf32>
    %c1_52 = arith.constant 1 : index
    %c0_53 = arith.constant 0 : index
    %94 = tpu.strided_load %arg10[%c1_52, %c0_53] {strides = array<i32: 4, 1>} : memref<32x128xf32, #tpu.memory_space<vmem>>, vector<8x128xf32>
    %c2_54 = arith.constant 2 : index
    %c0_55 = arith.constant 0 : index
    %95 = tpu.strided_load %arg10[%c2_54, %c0_55] {strides = array<i32: 4, 1>} : memref<32x128xf32, #tpu.memory_space<vmem>>, vector<8x128xf32>
    %c3_56 = arith.constant 3 : index
    %c0_57 = arith.constant 0 : index
    %96 = tpu.strided_load %arg10[%c3_56, %c0_57] {strides = array<i32: 4, 1>} : memref<32x128xf32, #tpu.memory_space<vmem>>, vector<8x128xf32>
    %97 = arith.maximumf %93, %94 : vector<8x128xf32>
    %98 = arith.maximumf %95, %96 : vector<8x128xf32>
    %99 = arith.maximumf %97, %98 : vector<8x128xf32>
    %cst_58 = arith.constant dense<0.000000e+00> : vector<8xf32>
    %100 = vector.multi_reduction <add>, %99, %cst_58 [1] : vector<8x128xf32> to vector<8xf32>
    %101 = vector.shape_cast %100 : vector<8xf32> to vector<8x1xf32>
    %cst_59 = arith.constant 1.280000e+02 : f32
    %102 = vector.broadcast %cst_59 : f32 to vector<8x1xf32>
    %103 = arith.divf %101, %102 : vector<8x1xf32>
    %104 = vector.broadcast %103 : vector<8x1xf32> to vector<8x128xf32>
    %105 = arith.subf %99, %104 : vector<8x128xf32>
    %106 = arith.mulf %105, %105 : vector<8x128xf32>
    %cst_60 = arith.constant dense<0.000000e+00> : vector<8xf32>
    %107 = vector.multi_reduction <add>, %106, %cst_60 [1] : vector<8x128xf32> to vector<8xf32>
    %108 = vector.shape_cast %107 : vector<8xf32> to vector<8x1xf32>
    %cst_61 = arith.constant 1.280000e+02 : f32
    %109 = vector.broadcast %cst_61 : f32 to vector<8x1xf32>
    %110 = arith.divf %108, %109 : vector<8x1xf32>
    %cst_62 = arith.constant 9.99999974E-6 : f32
    %111 = vector.broadcast %cst_62 : f32 to vector<8x1xf32>
    %112 = arith.addf %110, %111 : vector<8x1xf32>
    %113 = math.rsqrt %112 : vector<8x1xf32>
    %114 = vector.broadcast %113 : vector<8x1xf32> to vector<8x128xf32>
    %115 = arith.mulf %105, %114 : vector<8x128xf32>
    %116 = vector.broadcast %0 : vector<1x128xf32> to vector<8x128xf32>
    %117 = arith.mulf %115, %116 : vector<8x128xf32>
    %118 = vector.broadcast %1 : vector<1x128xf32> to vector<8x128xf32>
    %119 = arith.addf %117, %118 : vector<8x128xf32>
    %c0_63 = arith.constant 0 : index
    %c0_64 = arith.constant 0 : index
    %c0_65 = arith.constant 0 : index
    %120 = vector.load %arg8[%c0_63, %c0_64, %c0_65] : memref<1x8x128xf32, #tpu.memory_space<vmem>>, vector<1x8x128xf32>
    %121 = vector.shape_cast %120 : vector<1x8x128xf32> to vector<8x128xf32>
    %122 = vector.shape_cast %119 : vector<8x128xf32> to vector<1x8x128xf32>
    tpu.vector_store %arg8[%c0_63, %c0_64, %c0_65], %122 {strides = array<i32>} : memref<1x8x128xf32, #tpu.memory_space<vmem>>, vector<1x8x128xf32>,
    return
  }
  func.func @transform_0(%arg0: i32, %arg1: i32) -> (i32, i32, i32) {
    %c0_i32 = arith.constant 0 : i32
    %c0_i32_0 = arith.constant 0 : i32
    return %arg0, %arg1, %c0_i32 : i32, i32, i32
  }
  func.func @transform_1(%arg0: i32, %arg1: i32) -> (i32, i32) {
    %c0_i32 = arith.constant 0 : i32
    %c0_i32_0 = arith.constant 0 : i32
    %c0_i32_1 = arith.constant 0 : i32
    return %c0_i32, %c0_i32_0 : i32, i32
  }
  func.func @transform_2(%arg0: i32, %arg1: i32) -> (i32, i32) {
    %c0_i32 = arith.constant 0 : i32
    %c0_i32_0 = arith.constant 0 : i32
    %c0_i32_1 = arith.constant 0 : i32
    return %c0_i32, %c0_i32_0 : i32, i32
  }
  func.func @transform_3(%arg0: i32, %arg1: i32) -> (i32, i32, i32) {
    %c0_i32 = arith.constant 0 : i32
    %c0_i32_0 = arith.constant 0 : i32
    return %arg0, %arg1, %c0_i32 : i32, i32, i32
  }
  func.func @transform_4(%arg0: i32, %arg1: i32) -> (i32, i32, i32) {
    %c0_i32 = arith.constant 0 : i32
    %c0_i32_0 = arith.constant 0 : i32
    return %arg0, %arg1, %c0_i32 : i32, i32, i32
  }
  func.func @transform_5(%arg0: i32, %arg1: i32) -> (i32, i32, i32) {
    %c0_i32 = arith.constant 0 : i32
    %c0_i32_0 = arith.constant 0 : i32
    return %arg0, %arg1, %c0_i32 : i32, i32, i32
  }
  func.func @transform_6(%arg0: i32, %arg1: i32) -> (i32, i32, i32) {
    %c0_i32 = arith.constant 0 : i32
    %c0_i32_0 = arith.constant 0 : i32
    return %arg0, %arg1, %c0_i32 : i32, i32, i32
  }
}

</mosaic_0001>

<llo_original>
// kernel: tpu_custom_call.1
$region0: #{tpu_custom_call.1}
  #allocation0 [shape = 'u32[]', space=smem, size = 0x4, offset = 0x4, fixed_abs, tag = 'smem constant byte address 0x4 - core index']
  #allocation1 [shape = 'u32[144,128]{1,0:T(1,128)}', space=vmem, size = 0x12000, scoped, tag = 'internal scratch']
  #allocation2 [shape = 'f32[128,128]{1,0:T(8,128)}', space=vmem, size = 0x10000, scoped, tag = 'scratch operand']
  #allocation3 [shape = 'f32[32,128]{1,0:T(8,128)}', space=vmem, size = 0x4000, scoped, tag = 'scratch operand']
  %s0 = inlined_call_operand.hbm [shape: f32[2,1024,128], index: 0, kind: input, shape index: {}]
  %s1 = inlined_call_operand.vmem [shape: f32[1,128], index: 1, kind: input, shape index: {}]
  %s2 = inlined_call_operand.vmem [shape: f32[1,128], index: 2, kind: input, shape index: {}]
  %s3 = inlined_call_operand.hbm [shape: f32[2,1024,128], index: 3, kind: output, shape index: {0}]
  %s4 = inlined_call_operand.hbm [shape: f32[2,256,128], index: 4, kind: output, shape index: {1}]
  %s5 = inlined_call_operand.hbm [shape: f32[2,64,128], index: 5, kind: output, shape index: {2}]
  %s6 = inlined_call_operand.hbm [shape: f32[2,16,128], index: 6, kind: output, shape index: {3}]
  %7 = xla_tuple %s3, %s4, %s5, %s6
  %s8 = sld [smem:[#allocation0]]
  $region73: #{tpu_custom_call.1} parent=0
    _
  %s10 = ssub.s32 1, %s8
  %s11 = scalar_select 0, %s10, %s8
  $region1: #{tpu_custom_call.1} parent=0
    #allocation4 [shape = 'u8[524288]{0}', space=vmem, size = 0x80000, scoped, tag = 'input window, operand 0']
    #allocation5 [shape = 's32[2]{0}', space=sflag, size = 0x8, scoped, tag = 'scoped memory for tpu_custom_call.1']
    #allocation6 [shape = 's32[2]{0}', space=sflag, size = 0x8, scoped, tag = 'scoped memory for tpu_custom_call.1']
    #allocation7 [shape = 'u8[524288]{0}', space=vmem, size = 0x80000, scoped, tag = 'output window, operand 0']
    #allocation8 [shape = 'u8[131072]{0}', space=vmem, size = 0x20000, scoped, tag = 'output window, operand 1']
    #allocation9 [shape = 's32[2]{0}', space=sflag, size = 0x8, scoped, tag = 'scoped memory for tpu_custom_call.1']
    #allocation10 [shape = 'u8[32768]{0}', space=vmem, size = 0x8000, scoped, tag = 'output window, operand 2']
    #allocation11 [shape = 'u8[8192]{0}', space=vmem, size = 0x2000, scoped, tag = 'output window, operand 3']
    #allocation12 [shape = 's32[2]{0}', space=sflag, size = 0x8, scoped, tag = 'scoped memory for tpu_custom_call.1']
    %12 = vsyncpa [#allocation5], 0
    %s13 = scalar_lea.sflag [#allocation5], 1
    %14 = vsyncpa %s13, 0
    %15 = vsyncpa [#allocation6], 0
    %s16 = scalar_lea.sflag [#allocation6], 1
    %17 = vsyncpa %s16, 0
    %18 = vsyncpa [#allocation9], 0
    %s19 = scalar_lea.sflag [#allocation9], 1
    %20 = vsyncpa %s19, 0
    %21 = vsyncpa [#allocation12], 0
    %s22 = scalar_lea.sflag [#allocation12], 1
    %23 = vsyncpa %s22, 0
    loop: start=0, step=1, limit=6
    $region2: #{tpu_custom_call.1} parent=1 // loop_pre_header
      _
    $region3: #{tpu_custom_call.1} parent=1 // loop_header
      %s25 = sphi 0, %s29
      %p26 = scmp.ge.s32.totalorder %s25, 6
      %s32 = sphi 0, %s44
      %s33 = sphi 0, %s40
      %s34 = sphi 0, %s32
      %s35 = sphi 0, %s33
      %s36 = sphi 0, %s34
      %s37 = sphi 0, %s35
      %s49 = sphi 0, %s51
      %s52 = sphi 0, %s49
      %s53 = sphi 0, %s52
      %s69 = sphi 0, %s53
      %s73 = sphi 0, %s73
      %s75 = sphi 0, %s73
      %s76 = sphi 0, %s75
      %s90 = sphi 0, %s76
      %s94 = sphi 0, %s94
      %s96 = sphi 0, %s94
      %s97 = sphi 0, %s96
      %s111 = sphi 0, %s97
      %s119 = sphi 0, %s121
      %s122 = sphi 0, %s119
      %s123 = sphi 0, %s122
      %s139 = sphi 0, %s123
      %s147 = sphi 0, %s149
      %s150 = sphi 0, %s147
      %s151 = sphi 0, %s150
      %s167 = sphi 0, %s151
      %s175 = sphi 0, %s177
      %s178 = sphi 0, %s175
      %s179 = sphi 0, %s178
      %s195 = sphi 0, %s179
      %s203 = sphi 0, %s205
      %s206 = sphi 0, %s203
      %s207 = sphi 0, %s206
      %s223 = sphi 0, %s207
    $region4: #{tpu_custom_call.1} parent=1 // loop_header_branch
      %28 = sbr.rel (%p26) target = $region8
    $region5: #{tpu_custom_call.1} parent=1 // loop_body
      %s30 = ssub.s32 %s25, 1
      %s31 = ssub.s32 %s25, 2
      %s38 = sadd.s32 1, %s33
      %p39 = scmp.ge.s32.totalorder %s38, 2
      %s40 = scalar_select %p39, 0, %s38
      %s41 = sadd.s32 1, %s32
      %s42 = scalar_select %p39, %s41, %s32
      %p43 = scmp.ge.s32.totalorder %s42, 2
      %s44 = scalar_select %p43, 0, %s42
      %s45 = ssub.s32 %s32, %s44
      %s46 = ssub.s32 %s33, %s40
      %s47 = sor.u32 %s45, %s46
      %p48 = scmp.eq.s32.totalorder %s47, 0
      %s50 = sadd.s32 %s49, 1
      %s51 = scalar_select %p48, %s49, %s50
      %p54 = pneg %p48
      %p55 = scmp.eq.s32.totalorder %s25, 3
      %p56 = por %p54, %p55
      %p57 = scmp.ne.s32.totalorder %s49, %s52
      %p58 = scmp.eq.s32.totalorder %s25, 0
      %p59 = por %p57, %p58
      %p60 = scmp.ne.s32.totalorder %s49, %s52
      %p61 = scmp.eq.s32.totalorder %s30, 3
      %p62 = por %p60, %p61
      %p63 = scmp.ne.s32.totalorder %s52, %s53
      %p64 = scmp.eq.s32.totalorder %s30, 0
      %p65 = por %p63, %p64
      %p66 = scmp.ne.s32.totalorder %s52, %s53
      %p67 = scmp.eq.s32.totalorder %s31, 3
      %p68 = por %p66, %p67
      %p70 = scmp.ne.s32.totalorder %s53, %s69
      %p71 = scmp.eq.s32.totalorder %s31, 0
      %p72 = por %p70, %p71
      %s74 = sadd.s32 %s73, 1
      %p77 = scmp.eq.s32.totalorder %s25, 3
      %p78 = scmp.ne.s32.totalorder %s73, %s75
      %p79 = scmp.eq.s32.totalorder %s25, 0
      %p80 = por %p78, %p79
      %p81 = scmp.ne.s32.totalorder %s73, %s75
      %p82 = scmp.eq.s32.totalorder %s30, 3
      %p83 = por %p81, %p82
      %p84 = scmp.ne.s32.totalorder %s75, %s76
      %p85 = scmp.eq.s32.totalorder %s30, 0
      %p86 = por %p84, %p85
      %p87 = scmp.ne.s32.totalorder %s75, %s76
      %p88 = scmp.eq.s32.totalorder %s31, 3
      %p89 = por %p87, %p88
      %p91 = scmp.ne.s32.totalorder %s76, %s90
      %p92 = scmp.eq.s32.totalorder %s31, 0
      %p93 = por %p91, %p92
      %s95 = sadd.s32 %s94, 1
      %p98 = scmp.eq.s32.totalorder %s25, 3
      %p99 = scmp.ne.s32.totalorder %s94, %s96
      %p100 = scmp.eq.s32.totalorder %s25, 0
      %p101 = por %p99, %p100
      %p102 = scmp.ne.s32.totalorder %s94, %s96
      %p103 = scmp.eq.s32.totalorder %s30, 3
      %p104 = por %p102, %p103
      %p105 = scmp.ne.s32.totalorder %s96, %s97
      %p106 = scmp.eq.s32.totalorder %s30, 0
      %p107 = por %p105, %p106
      %p108 = scmp.ne.s32.totalorder %s96, %s97
      %p109 = scmp.eq.s32.totalorder %s31, 3
      %p110 = por %p108, %p109
      %p112 = scmp.ne.s32.totalorder %s97, %s111
      %p113 = scmp.eq.s32.totalorder %s31, 0
      %p114 = por %p112, %p113
      %s115 = ssub.s32 %s32, %s44
      %s116 = ssub.s32 %s33, %s40
      %s117 = sor.u32 %s115, %s116
      %p118 = scmp.eq.s32.totalorder %s117, 0
      %s120 = sadd.s32 %s119, 1
      %s121 = scalar_select %p118, %s119, %s120
      %p124 = pneg %p118
      %p125 = scmp.eq.s32.totalorder %s25, 3
      %p126 = por %p124, %p125
      %p127 = scmp.ne.s32.totalorder %s119, %s122
      %p128 = scmp.eq.s32.totalorder %s25, 0
      %p129 = por %p127, %p128
      %p130 = scmp.ne.s32.totalorder %s119, %s122
      %p131 = scmp.eq.s32.totalorder %s30, 3
      %p132 = por %p130, %p131
      %p133 = scmp.ne.s32.totalorder %s122, %s123
      %p134 = scmp.eq.s32.totalorder %s30, 0
      %p135 = por %p133, %p134
      %p136 = scmp.ne.s32.totalorder %s122, %s123
      %p137 = scmp.eq.s32.totalorder %s31, 3
      %p138 = por %p136, %p137
      %p140 = scmp.ne.s32.totalorder %s123, %s139
      %p141 = scmp.eq.s32.totalorder %s31, 0
      %p142 = por %p140, %p141
      %s143 = ssub.s32 %s32, %s44
      %s144 = ssub.s32 %s33, %s40
      %s145 = sor.u32 %s143, %s144
      %p146 = scmp.eq.s32.totalorder %s145, 0
      %s148 = sadd.s32 %s147, 1
      %s149 = scalar_select %p146, %s147, %s148
      %p152 = pneg %p146
      %p153 = scmp.eq.s32.totalorder %s25, 3
      %p154 = por %p152, %p153
      %p155 = scmp.ne.s32.totalorder %s147, %s150
      %p156 = scmp.eq.s32.totalorder %s25, 0
      %p157 = por %p155, %p156
      %p158 = scmp.ne.s32.totalorder %s147, %s150
      %p159 = scmp.eq.s32.totalorder %s30, 3
      %p160 = por %p158, %p159
      %p161 = scmp.ne.s32.totalorder %s150, %s151
      %p162 = scmp.eq.s32.totalorder %s30, 0
      %p163 = por %p161, %p162
      %p164 = scmp.ne.s32.totalorder %s150, %s151
      %p165 = scmp.eq.s32.totalorder %s31, 3
      %p166 = por %p164, %p165
      %p168 = scmp.ne.s32.totalorder %s151, %s167
      %p169 = scmp.eq.s32.totalorder %s31, 0
      %p170 = por %p168, %p169
      %s171 = ssub.s32 %s32, %s44
      %s172 = ssub.s32 %s33, %s40
      %s173 = sor.u32 %s171, %s172
      %p174 = scmp.eq.s32.totalorder %s173, 0
      %s176 = sadd.s32 %s175, 1
      %s177 = scalar_select %p174, %s175, %s176
      %p180 = pneg %p174
      %p181 = scmp.eq.s32.totalorder %s25, 3
      %p182 = por %p180, %p181
      %p183 = scmp.ne.s32.totalorder %s175, %s178
      %p184 = scmp.eq.s32.totalorder %s25, 0
      %p185 = por %p183, %p184
      %p186 = scmp.ne.s32.totalorder %s175, %s178
      %p187 = scmp.eq.s32.totalorder %s30, 3
      %p188 = por %p186, %p187
      %p189 = scmp.ne.s32.totalorder %s178, %s179
      %p190 = scmp.eq.s32.totalorder %s30, 0
      %p191 = por %p189, %p190
      %p192 = scmp.ne.s32.totalorder %s178, %s179
      %p193 = scmp.eq.s32.totalorder %s31, 3
      %p194 = por %p192, %p193
      %p196 = scmp.ne.s32.totalorder %s179, %s195
      %p197 = scmp.eq.s32.totalorder %s31, 0
      %p198 = por %p196, %p197
      %s199 = ssub.s32 %s32, %s44
      %s200 = ssub.s32 %s33, %s40
      %s201 = sor.u32 %s199, %s200
      %p202 = scmp.eq.s32.totalorder %s201, 0
      %s204 = sadd.s32 %s203, 1
      %s205 = scalar_select %p202, %s203, %s204
      %p208 = pneg %p202
      %p209 = scmp.eq.s32.totalorder %s25, 3
      %p210 = por %p208, %p209
      %p211 = scmp.ne.s32.totalorder %s203, %s206
      %p212 = scmp.eq.s32.totalorder %s25, 0
      %p213 = por %p211, %p212
      %p214 = scmp.ne.s32.totalorder %s203, %s206
      %p215 = scmp.eq.s32.totalorder %s30, 3
      %p216 = por %p214, %p215
      %p217 = scmp.ne.s32.totalorder %s206, %s207
      %p218 = scmp.eq.s32.totalorder %s30, 0
      %p219 = por %p217, %p218
      %p220 = scmp.ne.s32.totalorder %s206, %s207
      %p221 = scmp.eq.s32.totalorder %s31, 3
      %p222 = por %p220, %p221
      %p224 = scmp.ne.s32.totalorder %s207, %s223
      %p225 = scmp.eq.s32.totalorder %s31, 0
      %p226 = por %p224, %p225
      %p227 = scmp.le.s32.totalorder 1, %s25
      %p228 = scmp.lt.s32.totalorder %s25, 5
      %p229 = pnand %p227, %p228
      %p230 = pneg %p229
      // Predicated region
      $region9: #{tpu_custom_call.1} parent=5 // pred_check
        _
      $region10: #{tpu_custom_call.1} parent=5 // pred_check_branch
        %232 = sbr.rel (%p229) target = $region12
      $region11: #{tpu_custom_call.1} parent=5 // pred_region
        %s233 = ssub.s32 %s25, 1
        // Predicated region
        $region13: #{tpu_custom_call.1} parent=11 // pred_check
          %p234 = pneg %p86
        $region14: #{tpu_custom_call.1} parent=11 // pred_check_branch
          %236 = sbr.rel (%p234) target = $region16
        $region15: #{tpu_custom_call.1} parent=11 // pred_region
          _
        $region16: #{tpu_custom_call.1} parent=11 // pred_fallthru
          _
        // Predicated region
        $region17: #{tpu_custom_call.1} parent=11 // pred_check
          %p237 = pneg %p107
        $region18: #{tpu_custom_call.1} parent=11 // pred_check_branch
          %239 = sbr.rel (%p237) target = $region20
        $region19: #{tpu_custom_call.1} parent=11 // pred_region
          _
        $region20: #{tpu_custom_call.1} parent=11 // pred_fallthru
          _
      $region12: #{tpu_custom_call.1} parent=5 // pred_fallthru
        _
      %p240 = scmp.lt.s32.totalorder %s25, 4
      // Predicated region
      $region21: #{tpu_custom_call.1} parent=5 // pred_check
        %p241 = pneg %p240
      $region22: #{tpu_custom_call.1} parent=5 // pred_check_branch
        %243 = sbr.rel (%p241) target = $region24
      $region23: #{tpu_custom_call.1} parent=5 // pred_region
        // Predicated region
        $region25: #{tpu_custom_call.1} parent=23 // pred_check
          %p244 = pneg %p59
        $region26: #{tpu_custom_call.1} parent=23 // pred_check_branch
          %246 = sbr.rel (%p244) target = $region28
        $region27: #{tpu_custom_call.1} parent=23 // pred_region
          %s247 = sand.u32 %s49, 1
          %s248 = scalar_lea.sflag [#allocation5], %s247
          %s249 = sand.u32 %s49, 1
          %s250 = smul.addr %s249, 512
          %s251 = scalar_lea.vmem [#allocation4], %s250
          %s252 = smul.u32 64, %s33
          %s254 = ssub.s32 8192, 8192
          %255 = vsyncadd %s248, %s254
          %s256 = smul.addr %s32, 128
          %s257 = sadd.s32 %s252, %s256
          %s258 = smul.addr %s257, 128
          %s259 = scalar_lea.hbm %s0, %s258
          %s260 = sshll.u32 %s251, 4
          %s261 = int_to_ptr.vmem [resolvable:$true] %s260
          %266 = dma.hbm_to_vmem [thread:$0]  %s259, 8192, %s261, %s248, 128, 128, 8
        $region28: #{tpu_custom_call.1} parent=23 // pred_fallthru
          _
      $region24: #{tpu_custom_call.1} parent=5 // pred_fallthru
        _
      %p267 = scmp.le.s32.totalorder 1, %s25
      %p268 = scmp.lt.s32.totalorder %s25, 5
      %p269 = pnand %p267, %p268
      %p270 = pneg %p269
      // Predicated region
      $region29: #{tpu_custom_call.1} parent=5 // pred_check
        _
      $region30: #{tpu_custom_call.1} parent=5 // pred_check_branch
        %272 = sbr.rel (%p269) target = $region32
      $region31: #{tpu_custom_call.1} parent=5 // pred_region
        %s273 = ssub.s32 %s25, 1
        %s274 = sand.u32 %s52, 1
        %s275 = scalar_lea.sflag [#allocation5], %s274
        %s276 = sand.u32 %s52, 1
        %s277 = smul.addr %s276, 512
        %s278 = scalar_lea.vmem [#allocation4], %s277
        // Predicated region
        $region33: #{tpu_custom_call.1} parent=31 // pred_check
          %p279 = pneg %p65
        $region34: #{tpu_custom_call.1} parent=31 // pred_check_branch
          %281 = sbr.rel (%p279) target = $region36
        $region35: #{tpu_custom_call.1} parent=31 // pred_region
          %282 = dma.done %s275, 8192
        $region36: #{tpu_custom_call.1} parent=31 // pred_fallthru
          _
        %s283 = sand.u32 %s52, 1
        %s284 = scalar_lea.sflag [#allocation5], %s283
        %s285 = sand.u32 %s52, 1
        %s286 = smul.addr %s285, 512
        %s287 = scalar_lea.vmem [#allocation4], %s286
        %p288 = pneg %p65
        %p289 = pneg %p62
        %p290 = pneg %p86
        %p291 = pneg %p83
        %p292 = pneg %p107
        %p293 = pneg %p104
        %p294 = pneg %p135
        %p295 = pneg %p132
        %s296 = sand.u32 %s122, 1
        %s297 = scalar_lea.sflag [#allocation6], %s296
        %s298 = sand.u32 %s122, 1
        %s299 = smul.addr %s298, 512
        %s300 = scalar_lea.vmem [#allocation7], %s299
        %p301 = pneg %p163
        %p302 = pneg %p160
        %s303 = sand.u32 %s30, 1
        %s304 = scalar_lea.sflag [#allocation9], %s303
        %s305 = sand.u32 %s150, 1
        %s306 = smul.addr %s305, 128
        %s307 = scalar_lea.vmem [#allocation8], %s306
        %p308 = pneg %p191
        %p309 = pneg %p188
        %s310 = sand.u32 %s30, 1
        %s311 = scalar_lea.sflag [#allocation9], %s310
        %s312 = sand.u32 %s178, 1
        %s313 = smul.addr %s312, 32
        %s314 = scalar_lea.vmem [#allocation10], %s313
        %p315 = pneg %p219
        %p316 = pneg %p216
        %s317 = sand.u32 %s206, 1
        %s318 = scalar_lea.sflag [#allocation12], %s317
        %s319 = sand.u32 %s206, 1
        %s320 = smul.addr %s319, 8
        %s321 = scalar_lea.vmem [#allocation11], %s320
        %s322 = smul.u32 64, %s35
        %s323 = smul.u32 64, %s35
        %s324 = smul.u32 16, %s35
        %s325 = smul.u32 4, %s35
        %v326 = vld [vmem:[%s1] sm:$0x1]
        %v327 = vld [vmem:[%s2] sm:$0x1]
        %v328 = vld [vmem:[%s278] sm:$0xff]
        %v329 = vld [vmem:[%s278 + $0x8] sm:$0xff]
        %v330 = vld [vmem:[%s278 + $0x10] sm:$0xff]
        %v331 = vld [vmem:[%s278 + $0x18] sm:$0xff]
        %v332 = vld [vmem:[%s278 + $0x20] sm:$0xff]
        %v333 = vld [vmem:[%s278 + $0x28] sm:$0xff]
        %v334 = vld [vmem:[%s278 + $0x30] sm:$0xff]
        %v335 = vld [vmem:[%s278 + $0x38] sm:$0xff]
        %v336 = vld [vmem:[%s278 + $0x40] sm:$0xff]
        %v337 = vld [vmem:[%s278 + $0x48] sm:$0xff]
        %v338 = vld [vmem:[%s278 + $0x50] sm:$0xff]
        %v339 = vld [vmem:[%s278 + $0x58] sm:$0xff]
        %v340 = vld [vmem:[%s278 + $0x60] sm:$0xff]
        %v341 = vld [vmem:[%s278 + $0x68] sm:$0xff]
        %v342 = vld [vmem:[%s278 + $0x70] sm:$0xff]
        %v343 = vld [vmem:[%s278 + $0x78] sm:$0xff]
        %v344 = vld [vmem:[%s278 + $0x80] sm:$0xff]
        %v345 = vld [vmem:[%s278 + $0x88] sm:$0xff]
        %v346 = vld [vmem:[%s278 + $0x90] sm:$0xff]
        %v347 = vld [vmem:[%s278 + $0x98] sm:$0xff]
        %v348 = vld [vmem:[%s278 + $0xa0] sm:$0xff]
        %v349 = vld [vmem:[%s278 + $0xa8] sm:$0xff]
        %v350 = vld [vmem:[%s278 + $0xb0] sm:$0xff]
        %v351 = vld [vmem:[%s278 + $0xb8] sm:$0xff]
        %v352 = vld [vmem:[%s278 + $0xc0] sm:$0xff]
        %v353 = vld [vmem:[%s278 + $0xc8] sm:$0xff]
        %v354 = vld [vmem:[%s278 + $0xd0] sm:$0xff]
        %v355 = vld [vmem:[%s278 + $0xd8] sm:$0xff]
        %v356 = vld [vmem:[%s278 + $0xe0] sm:$0xff]
        %v357 = vld [vmem:[%s278 + $0xe8] sm:$0xff]
        %v358 = vld [vmem:[%s278 + $0xf0] sm:$0xff]
        %v359 = vld [vmem:[%s278 + $0xf8] sm:$0xff]
        %v360 = vld [vmem:[%s278 + $0x100] sm:$0xff]
        %v361 = vld [vmem:[%s278 + $0x108] sm:$0xff]
        %v362 = vld [vmem:[%s278 + $0x110] sm:$0xff]
        %v363 = vld [vmem:[%s278 + $0x118] sm:$0xff]
        %v364 = vld [vmem:[%s278 + $0x120] sm:$0xff]
        %v365 = vld [vmem:[%s278 + $0x128] sm:$0xff]
        %v366 = vld [vmem:[%s278 + $0x130] sm:$0xff]
        %v367 = vld [vmem:[%s278 + $0x138] sm:$0xff]
        %v368 = vld [vmem:[%s278 + $0x140] sm:$0xff]
        %v369 = vld [vmem:[%s278 + $0x148] sm:$0xff]
        %v370 = vld [vmem:[%s278 + $0x150] sm:$0xff]
        %v371 = vld [vmem:[%s278 + $0x158] sm:$0xff]
        %v372 = vld [vmem:[%s278 + $0x160] sm:$0xff]
        %v373 = vld [vmem:[%s278 + $0x168] sm:$0xff]
        %v374 = vld [vmem:[%s278 + $0x170] sm:$0xff]
        %v375 = vld [vmem:[%s278 + $0x178] sm:$0xff]
        %v376 = vld [vmem:[%s278 + $0x180] sm:$0xff]
        %v377 = vld [vmem:[%s278 + $0x188] sm:$0xff]
        %v378 = vld [vmem:[%s278 + $0x190] sm:$0xff]
        %v379 = vld [vmem:[%s278 + $0x198] sm:$0xff]
        %v380 = vld [vmem:[%s278 + $0x1a0] sm:$0xff]
        %v381 = vld [vmem:[%s278 + $0x1a8] sm:$0xff]
        %v382 = vld [vmem:[%s278 + $0x1b0] sm:$0xff]
        %v383 = vld [vmem:[%s278 + $0x1b8] sm:$0xff]
        %v384 = vld [vmem:[%s278 + $0x1c0] sm:$0xff]
        %v385 = vld [vmem:[%s278 + $0x1c8] sm:$0xff]
        %v386 = vld [vmem:[%s278 + $0x1d0] sm:$0xff]
        %v387 = vld [vmem:[%s278 + $0x1d8] sm:$0xff]
        %v388 = vld [vmem:[%s278 + $0x1e0] sm:$0xff]
        %v389 = vld [vmem:[%s278 + $0x1e8] sm:$0xff]
        %v390 = vld [vmem:[%s278 + $0x1f0] sm:$0xff]
        %v391 = vld [vmem:[%s278 + $0x1f8] sm:$0xff]
        %392 = vadd.xlane.f32.xlu0 %v328
        %v393 = vpop.xlane.xlu0 %392
        %394 = vadd.xlane.f32.xlu0 %v329
        %v395 = vpop.xlane.xlu0 %394
        %396 = vadd.xlane.f32.xlu0 %v330
        %v397 = vpop.xlane.xlu0 %396
        %398 = vadd.xlane.f32.xlu0 %v331
        %v399 = vpop.xlane.xlu0 %398
        %400 = vadd.xlane.f32.xlu0 %v332
        %v401 = vpop.xlane.xlu0 %400
        %402 = vadd.xlane.f32.xlu0 %v333
        %v403 = vpop.xlane.xlu0 %402
        %404 = vadd.xlane.f32.xlu0 %v334
        %v405 = vpop.xlane.xlu0 %404
        %406 = vadd.xlane.f32.xlu0 %v335
        %v407 = vpop.xlane.xlu0 %406
        %408 = vadd.xlane.f32.xlu0 %v336
        %v409 = vpop.xlane.xlu0 %408
        %410 = vadd.xlane.f32.xlu0 %v337
        %v411 = vpop.xlane.xlu0 %410
        %412 = vadd.xlane.f32.xlu0 %v338
        %v413 = vpop.xlane.xlu0 %412
        %414 = vadd.xlane.f32.xlu0 %v339
        %v415 = vpop.xlane.xlu0 %414
        %416 = vadd.xlane.f32.xlu0 %v340
        %v417 = vpop.xlane.xlu0 %416
        %418 = vadd.xlane.f32.xlu0 %v341
        %v419 = vpop.xlane.xlu0 %418
        %420 = vadd.xlane.f32.xlu0 %v342
        %v421 = vpop.xlane.xlu0 %420
        %422 = vadd.xlane.f32.xlu0 %v343
        %v423 = vpop.xlane.xlu0 %422
        %424 = vadd.xlane.f32.xlu0 %v344
        %v425 = vpop.xlane.xlu0 %424
        %426 = vadd.xlane.f32.xlu0 %v345
        %v427 = vpop.xlane.xlu0 %426
        %428 = vadd.xlane.f32.xlu0 %v346
        %v429 = vpop.xlane.xlu0 %428
        %430 = vadd.xlane.f32.xlu0 %v347
        %v431 = vpop.xlane.xlu0 %430
        %432 = vadd.xlane.f32.xlu0 %v348
        %v433 = vpop.xlane.xlu0 %432
        %434 = vadd.xlane.f32.xlu0 %v349
        %v435 = vpop.xlane.xlu0 %434
        %436 = vadd.xlane.f32.xlu0 %v350
        %v437 = vpop.xlane.xlu0 %436
        %438 = vadd.xlane.f32.xlu0 %v351
        %v439 = vpop.xlane.xlu0 %438
        %440 = vadd.xlane.f32.xlu0 %v352
        %v441 = vpop.xlane.xlu0 %440
        %442 = vadd.xlane.f32.xlu0 %v353
        %v443 = vpop.xlane.xlu0 %442
        %444 = vadd.xlane.f32.xlu0 %v354
        %v445 = vpop.xlane.xlu0 %444
        %446 = vadd.xlane.f32.xlu0 %v355
        %v447 = vpop.xlane.xlu0 %446
        %448 = vadd.xlane.f32.xlu0 %v356
        %v449 = vpop.xlane.xlu0 %448
        %450 = vadd.xlane.f32.xlu0 %v357
        %v451 = vpop.xlane.xlu0 %450
        %452 = vadd.xlane.f32.xlu0 %v358
        %v453 = vpop.xlane.xlu0 %452
        %454 = vadd.xlane.f32.xlu0 %v359
        %v455 = vpop.xlane.xlu0 %454
        %456 = vadd.xlane.f32.xlu0 %v360
        %v457 = vpop.xlane.xlu0 %456
        %458 = vadd.xlane.f32.xlu0 %v361
        %v459 = vpop.xlane.xlu0 %458
        %460 = vadd.xlane.f32.xlu0 %v362
        %v461 = vpop.xlane.xlu0 %460
        %462 = vadd.xlane.f32.xlu0 %v363
        %v463 = vpop.xlane.xlu0 %462
        %464 = vadd.xlane.f32.xlu0 %v364
        %v465 = vpop.xlane.xlu0 %464
        %466 = vadd.xlane.f32.xlu0 %v365
        %v467 = vpop.xlane.xlu0 %466
        %468 = vadd.xlane.f32.xlu0 %v366
        %v469 = vpop.xlane.xlu0 %468
        %470 = vadd.xlane.f32.xlu0 %v367
        %v471 = vpop.xlane.xlu0 %470
        %472 = vadd.xlane.f32.xlu0 %v368
        %v473 = vpop.xlane.xlu0 %472
        %474 = vadd.xlane.f32.xlu0 %v369
        %v475 = vpop.xlane.xlu0 %474
        %476 = vadd.xlane.f32.xlu0 %v370
        %v477 = vpop.xlane.xlu0 %476
        %478 = vadd.xlane.f32.xlu0 %v371
        %v479 = vpop.xlane.xlu0 %478
        %480 = vadd.xlane.f32.xlu0 %v372
        %v481 = vpop.xlane.xlu0 %480
        %482 = vadd.xlane.f32.xlu0 %v373
        %v483 = vpop.xlane.xlu0 %482
        %484 = vadd.xlane.f32.xlu0 %v374
        %v485 = vpop.xlane.xlu0 %484
        %486 = vadd.xlane.f32.xlu0 %v375
        %v487 = vpop.xlane.xlu0 %486
        %488 = vadd.xlane.f32.xlu0 %v376
        %v489 = vpop.xlane.xlu0 %488
        %490 = vadd.xlane.f32.xlu0 %v377
        %v491 = vpop.xlane.xlu0 %490
        %492 = vadd.xlane.f32.xlu0 %v378
        %v493 = vpop.xlane.xlu0 %492
        %494 = vadd.xlane.f32.xlu0 %v379
        %v495 = vpop.xlane.xlu0 %494
        %496 = vadd.xlane.f32.xlu0 %v380
        %v497 = vpop.xlane.xlu0 %496
        %498 = vadd.xlane.f32.xlu0 %v381
        %v499 = vpop.xlane.xlu0 %498
        %500 = vadd.xlane.f32.xlu0 %v382
        %v501 = vpop.xlane.xlu0 %500
        %502 = vadd.xlane.f32.xlu0 %v383
        %v503 = vpop.xlane.xlu0 %502
        %504 = vadd.xlane.f32.xlu0 %v384
        %v505 = vpop.xlane.xlu0 %504
        %506 = vadd.xlane.f32.xlu0 %v385
        %v507 = vpop.xlane.xlu0 %506
        %508 = vadd.xlane.f32.xlu0 %v386
        %v509 = vpop.xlane.xlu0 %508
        %510 = vadd.xlane.f32.xlu0 %v387
        %v511 = vpop.xlane.xlu0 %510
        %512 = vadd.xlane.f32.xlu0 %v388
        %v513 = vpop.xlane.xlu0 %512
        %514 = vadd.xlane.f32.xlu0 %v389
        %v515 = vpop.xlane.xlu0 %514
        %516 = vadd.xlane.f32.xlu0 %v390
        %v517 = vpop.xlane.xlu0 %516
        %518 = vadd.xlane.f32.xlu0 %v391
        %v519 = vpop.xlane.xlu0 %518
        %v520 = vrcp.pop 128.0
        %v521 = vmul.f32 %v393, %v520
        %v522 = vmul.f32 %v395, %v520
        %v523 = vmul.f32 %v397, %v520
        %v524 = vmul.f32 %v399, %v520
        %v525 = vmul.f32 %v401, %v520
        %v526 = vmul.f32 %v403, %v520
        %v527 = vmul.f32 %v405, %v520
        %v528 = vmul.f32 %v407, %v520
        %v529 = vmul.f32 %v409, %v520
        %v530 = vmul.f32 %v411, %v520
        %v531 = vmul.f32 %v413, %v520
        %v532 = vmul.f32 %v415, %v520
        %v533 = vmul.f32 %v417, %v520
        %v534 = vmul.f32 %v419, %v520
        %v535 = vmul.f32 %v421, %v520
        %v536 = vmul.f32 %v423, %v520
        %v537 = vmul.f32 %v425, %v520
        %v538 = vmul.f32 %v427, %v520
        %v539 = vmul.f32 %v429, %v520
        %v540 = vmul.f32 %v431, %v520
        %v541 = vmul.f32 %v433, %v520
        %v542 = vmul.f32 %v435, %v520
        %v543 = vmul.f32 %v437, %v520
        %v544 = vmul.f32 %v439, %v520
        %v545 = vmul.f32 %v441, %v520
        %v546 = vmul.f32 %v443, %v520
        %v547 = vmul.f32 %v445, %v520
        %v548 = vmul.f32 %v447, %v520
        %v549 = vmul.f32 %v449, %v520
        %v550 = vmul.f32 %v451, %v520
        %v551 = vmul.f32 %v453, %v520
        %v552 = vmul.f32 %v455, %v520
        %v553 = vmul.f32 %v457, %v520
        %v554 = vmul.f32 %v459, %v520
        %v555 = vmul.f32 %v461, %v520
        %v556 = vmul.f32 %v463, %v520
        %v557 = vmul.f32 %v465, %v520
        %v558 = vmul.f32 %v467, %v520
        %v559 = vmul.f32 %v469, %v520
        %v560 = vmul.f32 %v471, %v520
        %v561 = vmul.f32 %v473, %v520
        %v562 = vmul.f32 %v475, %v520
        %v563 = vmul.f32 %v477, %v520
        %v564 = vmul.f32 %v479, %v520
        %v565 = vmul.f32 %v481, %v520
        %v566 = vmul.f32 %v483, %v520
        %v567 = vmul.f32 %v485, %v520
        %v568 = vmul.f32 %v487, %v520
        %v569 = vmul.f32 %v489, %v520
        %v570 = vmul.f32 %v491, %v520
        %v571 = vmul.f32 %v493, %v520
        %v572 = vmul.f32 %v495, %v520
        %v573 = vmul.f32 %v497, %v520
        %v574 = vmul.f32 %v499, %v520
        %v575 = vmul.f32 %v501, %v520
        %v576 = vmul.f32 %v503, %v520
        %v577 = vmul.f32 %v505, %v520
        %v578 = vmul.f32 %v507, %v520
        %v579 = vmul.f32 %v509, %v520
        %v580 = vmul.f32 %v511, %v520
        %v581 = vmul.f32 %v513, %v520
        %v582 = vmul.f32 %v515, %v520
        %v583 = vmul.f32 %v517, %v520
        %v584 = vmul.f32 %v519, %v520
        %v585 = vsub.f32 %v328, %v521
        %v586 = vsub.f32 %v329, %v522
        %v587 = vsub.f32 %v330, %v523
        %v588 = vsub.f32 %v331, %v524
        %v589 = vsub.f32 %v332, %v525
        %v590 = vsub.f32 %v333, %v526
        %v591 = vsub.f32 %v334, %v527
        %v592 = vsub.f32 %v335, %v528
        %v593 = vsub.f32 %v336, %v529
        %v594 = vsub.f32 %v337, %v530
        %v595 = vsub.f32 %v338, %v531
        %v596 = vsub.f32 %v339, %v532
        %v597 = vsub.f32 %v340, %v533
        %v598 = vsub.f32 %v341, %v534
        %v599 = vsub.f32 %v342, %v535
        %v600 = vsub.f32 %v343, %v536
        %v601 = vsub.f32 %v344, %v537
        %v602 = vsub.f32 %v345, %v538
        %v603 = vsub.f32 %v346, %v539
        %v604 = vsub.f32 %v347, %v540
        %v605 = vsub.f32 %v348, %v541
        %v606 = vsub.f32 %v349, %v542
        %v607 = vsub.f32 %v350, %v543
        %v608 = vsub.f32 %v351, %v544
        %v609 = vsub.f32 %v352, %v545
        %v610 = vsub.f32 %v353, %v546
        %v611 = vsub.f32 %v354, %v547
        %v612 = vsub.f32 %v355, %v548
        %v613 = vsub.f32 %v356, %v549
        %v614 = vsub.f32 %v357, %v550
        %v615 = vsub.f32 %v358, %v551
        %v616 = vsub.f32 %v359, %v552
        %v617 = vsub.f32 %v360, %v553
        %v618 = vsub.f32 %v361, %v554
        %v619 = vsub.f32 %v362, %v555
        %v620 = vsub.f32 %v363, %v556
        %v621 = vsub.f32 %v364, %v557
        %v622 = vsub.f32 %v365, %v558
        %v623 = vsub.f32 %v366, %v559
        %v624 = vsub.f32 %v367, %v560
        %v625 = vsub.f32 %v368, %v561
        %v626 = vsub.f32 %v369, %v562
        %v627 = vsub.f32 %v370, %v563
        %v628 = vsub.f32 %v371, %v564
        %v629 = vsub.f32 %v372, %v565
        %v630 = vsub.f32 %v373, %v566
        %v631 = vsub.f32 %v374, %v567
        %v632 = vsub.f32 %v375, %v568
        %v633 = vsub.f32 %v376, %v569
        %v634 = vsub.f32 %v377, %v570
        %v635 = vsub.f32 %v378, %v571
        %v636 = vsub.f32 %v379, %v572
        %v637 = vsub.f32 %v380, %v573
        %v638 = vsub.f32 %v381, %v574
        %v639 = vsub.f32 %v382, %v575
        %v640 = vsub.f32 %v383, %v576
        %v641 = vsub.f32 %v384, %v577
        %v642 = vsub.f32 %v385, %v578
        %v643 = vsub.f32 %v386, %v579
        %v644 = vsub.f32 %v387, %v580
        %v645 = vsub.f32 %v388, %v581
        %v646 = vsub.f32 %v389, %v582
        %v647 = vsub.f32 %v390, %v583
        %v648 = vsub.f32 %v391, %v584
        %v649 = vmul.f32 %v585, %v585
        %v650 = vmul.f32 %v586, %v586
        %v651 = vmul.f32 %v587, %v587
        %v652 = vmul.f32 %v588, %v588
        %v653 = vmul.f32 %v589, %v589
        %v654 = vmul.f32 %v590, %v590
        %v655 = vmul.f32 %v591, %v591
        %v656 = vmul.f32 %v592, %v592
        %v657 = vmul.f32 %v593, %v593
        %v658 = vmul.f32 %v594, %v594
        %v659 = vmul.f32 %v595, %v595
        %v660 = vmul.f32 %v596, %v596
        %v661 = vmul.f32 %v597, %v597
        %v662 = vmul.f32 %v598, %v598
        %v663 = vmul.f32 %v599, %v599
        %v664 = vmul.f32 %v600, %v600
        %v665 = vmul.f32 %v601, %v601
        %v666 = vmul.f32 %v602, %v602
        %v667 = vmul.f32 %v603, %v603
        %v668 = vmul.f32 %v604, %v604
        %v669 = vmul.f32 %v605, %v605
        %v670 = vmul.f32 %v606, %v606
        %v671 = vmul.f32 %v607, %v607
        %v672 = vmul.f32 %v608, %v608
        %v673 = vmul.f32 %v609, %v609
        %v674 = vmul.f32 %v610, %v610
        %v675 = vmul.f32 %v611, %v611
        %v676 = vmul.f32 %v612, %v612
        %v677 = vmul.f32 %v613, %v613
        %v678 = vmul.f32 %v614, %v614
        %v679 = vmul.f32 %v615, %v615
        %v680 = vmul.f32 %v616, %v616
        %v681 = vmul.f32 %v617, %v617
        %v682 = vmul.f32 %v618, %v618
        %v683 = vmul.f32 %v619, %v619
        %v684 = vmul.f32 %v620, %v620
        %v685 = vmul.f32 %v621, %v621
        %v686 = vmul.f32 %v622, %v622
        %v687 = vmul.f32 %v623, %v623
        %v688 = vmul.f32 %v624, %v624
        %v689 = vmul.f32 %v625, %v625
        %v690 = vmul.f32 %v626, %v626
        %v691 = vmul.f32 %v627, %v627
        %v692 = vmul.f32 %v628, %v628
        %v693 = vmul.f32 %v629, %v629
        %v694 = vmul.f32 %v630, %v630
        %v695 = vmul.f32 %v631, %v631
        %v696 = vmul.f32 %v632, %v632
        %v697 = vmul.f32 %v633, %v633
        %v698 = vmul.f32 %v634, %v634
        %v699 = vmul.f32 %v635, %v635
        %v700 = vmul.f32 %v636, %v636
        %v701 = vmul.f32 %v637, %v637
        %v702 = vmul.f32 %v638, %v638
        %v703 = vmul.f32 %v639, %v639
        %v704 = vmul.f32 %v640, %v640
        %v705 = vmul.f32 %v641, %v641
        %v706 = vmul.f32 %v642, %v642
        %v707 = vmul.f32 %v643, %v643
        %v708 = vmul.f32 %v644, %v644
        %v709 = vmul.f32 %v645, %v645
        %v710 = vmul.f32 %v646, %v646
        %v711 = vmul.f32 %v647, %v647
        %v712 = vmul.f32 %v648, %v648
        %713 = vadd.xlane.f32.xlu0 %v649
        %v714 = vpop.xlane.xlu0 %713
        %715 = vadd.xlane.f32.xlu0 %v650
        %v716 = vpop.xlane.xlu0 %715
        %717 = vadd.xlane.f32.xlu0 %v651
        %v718 = vpop.xlane.xlu0 %717
        %719 = vadd.xlane.f32.xlu0 %v652
        %v720 = vpop.xlane.xlu0 %719
        %721 = vadd.xlane.f32.xlu0 %v653
        %v722 = vpop.xlane.xlu0 %721
        %723 = vadd.xlane.f32.xlu0 %v654
        %v724 = vpop.xlane.xlu0 %723
        %725 = vadd.xlane.f32.xlu0 %v655
        %v726 = vpop.xlane.xlu0 %725
        %727 = vadd.xlane.f32.xlu0 %v656
        %v728 = vpop.xlane.xlu0 %727
        %729 = vadd.xlane.f32.xlu0 %v657
        %v730 = vpop.xlane.xlu0 %729
        %731 = vadd.xlane.f32.xlu0 %v658
        %v732 = vpop.xlane.xlu0 %731
        %733 = vadd.xlane.f32.xlu0 %v659
        %v734 = vpop.xlane.xlu0 %733
        %735 = vadd.xlane.f32.xlu0 %v660
        %v736 = vpop.xlane.xlu0 %735
        %737 = vadd.xlane.f32.xlu0 %v661
        %v738 = vpop.xlane.xlu0 %737
        %739 = vadd.xlane.f32.xlu0 %v662
        %v740 = vpop.xlane.xlu0 %739
        %741 = vadd.xlane.f32.xlu0 %v663
        %v742 = vpop.xlane.xlu0 %741
        %743 = vadd.xlane.f32.xlu0 %v664
        %v744 = vpop.xlane.xlu0 %743
        %745 = vadd.xlane.f32.xlu0 %v665
        %v746 = vpop.xlane.xlu0 %745
        %747 = vadd.xlane.f32.xlu0 %v666
        %v748 = vpop.xlane.xlu0 %747
        %749 = vadd.xlane.f32.xlu0 %v667
        %v750 = vpop.xlane.xlu0 %749
        %751 = vadd.xlane.f32.xlu0 %v668
        %v752 = vpop.xlane.xlu0 %751
        %753 = vadd.xlane.f32.xlu0 %v669
        %v754 = vpop.xlane.xlu0 %753
        %755 = vadd.xlane.f32.xlu0 %v670
        %v756 = vpop.xlane.xlu0 %755
        %757 = vadd.xlane.f32.xlu0 %v671
        %v758 = vpop.xlane.xlu0 %757
        %759 = vadd.xlane.f32.xlu0 %v672
        %v760 = vpop.xlane.xlu0 %759
        %761 = vadd.xlane.f32.xlu0 %v673
        %v762 = vpop.xlane.xlu0 %761
        %763 = vadd.xlane.f32.xlu0 %v674
        %v764 = vpop.xlane.xlu0 %763
        %765 = vadd.xlane.f32.xlu0 %v675
        %v766 = vpop.xlane.xlu0 %765
        %767 = vadd.xlane.f32.xlu0 %v676
        %v768 = vpop.xlane.xlu0 %767
        %769 = vadd.xlane.f32.xlu0 %v677
        %v770 = vpop.xlane.xlu0 %769
        %771 = vadd.xlane.f32.xlu0 %v678
        %v772 = vpop.xlane.xlu0 %771
        %773 = vadd.xlane.f32.xlu0 %v679
        %v774 = vpop.xlane.xlu0 %773
        %775 = vadd.xlane.f32.xlu0 %v680
        %v776 = vpop.xlane.xlu0 %775
        %777 = vadd.xlane.f32.xlu0 %v681
        %v778 = vpop.xlane.xlu0 %777
        %779 = vadd.xlane.f32.xlu0 %v682
        %v780 = vpop.xlane.xlu0 %779
        %781 = vadd.xlane.f32.xlu0 %v683
        %v782 = vpop.xlane.xlu0 %781
        %783 = vadd.xlane.f32.xlu0 %v684
        %v784 = vpop.xlane.xlu0 %783
        %785 = vadd.xlane.f32.xlu0 %v685
        %v786 = vpop.xlane.xlu0 %785
        %787 = vadd.xlane.f32.xlu0 %v686
        %v788 = vpop.xlane.xlu0 %787
        %789 = vadd.xlane.f32.xlu0 %v687
        %v790 = vpop.xlane.xlu0 %789
        %791 = vadd.xlane.f32.xlu0 %v688
        %v792 = vpop.xlane.xlu0 %791
        %793 = vadd.xlane.f32.xlu0 %v689
        %v794 = vpop.xlane.xlu0 %793
        %795 = vadd.xlane.f32.xlu0 %v690
        %v796 = vpop.xlane.xlu0 %795
        %797 = vadd.xlane.f32.xlu0 %v691
        %v798 = vpop.xlane.xlu0 %797
        %799 = vadd.xlane.f32.xlu0 %v692
        %v800 = vpop.xlane.xlu0 %799
        %801 = vadd.xlane.f32.xlu0 %v693
        %v802 = vpop.xlane.xlu0 %801
        %803 = vadd.xlane.f32.xlu0 %v694
        %v804 = vpop.xlane.xlu0 %803
        %805 = vadd.xlane.f32.xlu0 %v695
        %v806 = vpop.xlane.xlu0 %805
        %807 = vadd.xlane.f32.xlu0 %v696
        %v808 = vpop.xlane.xlu0 %807
        %809 = vadd.xlane.f32.xlu0 %v697
        %v810 = vpop.xlane.xlu0 %809
        %811 = vadd.xlane.f32.xlu0 %v698
        %v812 = vpop.xlane.xlu0 %811
        %813 = vadd.xlane.f32.xlu0 %v699
        %v814 = vpop.xlane.xlu0 %813
        %815 = vadd.xlane.f32.xlu0 %v700
        %v816 = vpop.xlane.xlu0 %815
        %817 = vadd.xlane.f32.xlu0 %v701
        %v818 = vpop.xlane.xlu0 %817
        %819 = vadd.xlane.f32.xlu0 %v702
        %v820 = vpop.xlane.xlu0 %819
        %821 = vadd.xlane.f32.xlu0 %v703
        %v822 = vpop.xlane.xlu0 %821
        %823 = vadd.xlane.f32.xlu0 %v704
        %v824 = vpop.xlane.xlu0 %823
        %825 = vadd.xlane.f32.xlu0 %v705
        %v826 = vpop.xlane.xlu0 %825
        %827 = vadd.xlane.f32.xlu0 %v706
        %v828 = vpop.xlane.xlu0 %827
        %829 = vadd.xlane.f32.xlu0 %v707
        %v830 = vpop.xlane.xlu0 %829
        %831 = vadd.xlane.f32.xlu0 %v708
        %v832 = vpop.xlane.xlu0 %831
        %833 = vadd.xlane.f32.xlu0 %v709
        %v834 = vpop.xlane.xlu0 %833
        %835 = vadd.xlane.f32.xlu0 %v710
        %v836 = vpop.xlane.xlu0 %835
        %837 = vadd.xlane.f32.xlu0 %v711
        %v838 = vpop.xlane.xlu0 %837
        %839 = vadd.xlane.f32.xlu0 %v712
        %v840 = vpop.xlane.xlu0 %839
        %v841 = vmul.f32 %v714, %v520
        %v842 = vmul.f32 %v716, %v520
        %v843 = vmul.f32 %v718, %v520
        %v844 = vmul.f32 %v720, %v520
        %v845 = vmul.f32 %v722, %v520
        %v846 = vmul.f32 %v724, %v520
        %v847 = vmul.f32 %v726, %v520
        %v848 = vmul.f32 %v728, %v520
        %v849 = vmul.f32 %v730, %v520
        %v850 = vmul.f32 %v732, %v520
        %v851 = vmul.f32 %v734, %v520
        %v852 = vmul.f32 %v736, %v520
        %v853 = vmul.f32 %v738, %v520
        %v854 = vmul.f32 %v740, %v520
        %v855 = vmul.f32 %v742, %v520
        %v856 = vmul.f32 %v744, %v520
        %v857 = vmul.f32 %v746, %v520
        %v858 = vmul.f32 %v748, %v520
        %v859 = vmul.f32 %v750, %v520
        %v860 = vmul.f32 %v752, %v520
        %v861 = vmul.f32 %v754, %v520
        %v862 = vmul.f32 %v756, %v520
        %v863 = vmul.f32 %v758, %v520
        %v864 = vmul.f32 %v760, %v520
        %v865 = vmul.f32 %v762, %v520
        %v866 = vmul.f32 %v764, %v520
        %v867 = vmul.f32 %v766, %v520
        %v868 = vmul.f32 %v768, %v520
        %v869 = vmul.f32 %v770, %v520
        %v870 = vmul.f32 %v772, %v520
        %v871 = vmul.f32 %v774, %v520
        %v872 = vmul.f32 %v776, %v520
        %v873 = vmul.f32 %v778, %v520
        %v874 = vmul.f32 %v780, %v520
        %v875 = vmul.f32 %v782, %v520
        %v876 = vmul.f32 %v784, %v520
        %v877 = vmul.f32 %v786, %v520
        %v878 = vmul.f32 %v788, %v520
        %v879 = vmul.f32 %v790, %v520
        %v880 = vmul.f32 %v792, %v520
        %v881 = vmul.f32 %v794, %v520
        %v882 = vmul.f32 %v796, %v520
        %v883 = vmul.f32 %v798, %v520
        %v884 = vmul.f32 %v800, %v520
        %v885 = vmul.f32 %v802, %v520
        %v886 = vmul.f32 %v804, %v520
        %v887 = vmul.f32 %v806, %v520
        %v888 = vmul.f32 %v808, %v520
        %v889 = vmul.f32 %v810, %v520
        %v890 = vmul.f32 %v812, %v520
        %v891 = vmul.f32 %v814, %v520
        %v892 = vmul.f32 %v816, %v520
        %v893 = vmul.f32 %v818, %v520
        %v894 = vmul.f32 %v820, %v520
        %v895 = vmul.f32 %v822, %v520
        %v896 = vmul.f32 %v824, %v520
        %v897 = vmul.f32 %v826, %v520
        %v898 = vmul.f32 %v828, %v520
        %v899 = vmul.f32 %v830, %v520
        %v900 = vmul.f32 %v832, %v520
        %v901 = vmul.f32 %v834, %v520
        %v902 = vmul.f32 %v836, %v520
        %v903 = vmul.f32 %v838, %v520
        %v904 = vmul.f32 %v840, %v520
        %v905 = vadd.f32 %v841, 1e-05
        %v906 = vadd.f32 %v842, 1e-05
        %v907 = vadd.f32 %v843, 1e-05
        %v908 = vadd.f32 %v844, 1e-05
        %v909 = vadd.f32 %v845, 1e-05
        %v910 = vadd.f32 %v846, 1e-05
        %v911 = vadd.f32 %v847, 1e-05
        %v912 = vadd.f32 %v848, 1e-05
        %v913 = vadd.f32 %v849, 1e-05
        %v914 = vadd.f32 %v850, 1e-05
        %v915 = vadd.f32 %v851, 1e-05
        %v916 = vadd.f32 %v852, 1e-05
        %v917 = vadd.f32 %v853, 1e-05
        %v918 = vadd.f32 %v854, 1e-05
        %v919 = vadd.f32 %v855, 1e-05
        %v920 = vadd.f32 %v856, 1e-05
        %v921 = vadd.f32 %v857, 1e-05
        %v922 = vadd.f32 %v858, 1e-05
        %v923 = vadd.f32 %v859, 1e-05
        %v924 = vadd.f32 %v860, 1e-05
        %v925 = vadd.f32 %v861, 1e-05
        %v926 = vadd.f32 %v862, 1e-05
        %v927 = vadd.f32 %v863, 1e-05
        %v928 = vadd.f32 %v864, 1e-05
        %v929 = vadd.f32 %v865, 1e-05
        %v930 = vadd.f32 %v866, 1e-05
        %v931 = vadd.f32 %v867, 1e-05
        %v932 = vadd.f32 %v868, 1e-05
        %v933 = vadd.f32 %v869, 1e-05
        %v934 = vadd.f32 %v870, 1e-05
        %v935 = vadd.f32 %v871, 1e-05
        %v936 = vadd.f32 %v872, 1e-05
        %v937 = vadd.f32 %v873, 1e-05
        %v938 = vadd.f32 %v874, 1e-05
        %v939 = vadd.f32 %v875, 1e-05
        %v940 = vadd.f32 %v876, 1e-05
        %v941 = vadd.f32 %v877, 1e-05
        %v942 = vadd.f32 %v878, 1e-05
        %v943 = vadd.f32 %v879, 1e-05
        %v944 = vadd.f32 %v880, 1e-05
        %v945 = vadd.f32 %v881, 1e-05
        %v946 = vadd.f32 %v882, 1e-05
        %v947 = vadd.f32 %v883, 1e-05
        %v948 = vadd.f32 %v884, 1e-05
        %v949 = vadd.f32 %v885, 1e-05
        %v950 = vadd.f32 %v886, 1e-05
        %v951 = vadd.f32 %v887, 1e-05
        %v952 = vadd.f32 %v888, 1e-05
        %v953 = vadd.f32 %v889, 1e-05
        %v954 = vadd.f32 %v890, 1e-05
        %v955 = vadd.f32 %v891, 1e-05
        %v956 = vadd.f32 %v892, 1e-05
        %v957 = vadd.f32 %v893, 1e-05
        %v958 = vadd.f32 %v894, 1e-05
        %v959 = vadd.f32 %v895, 1e-05
        %v960 = vadd.f32 %v896, 1e-05
        %v961 = vadd.f32 %v897, 1e-05
        %v962 = vadd.f32 %v898, 1e-05
        %v963 = vadd.f32 %v899, 1e-05
        %v964 = vadd.f32 %v900, 1e-05
        %v965 = vadd.f32 %v901, 1e-05
        %v966 = vadd.f32 %v902, 1e-05
        %v967 = vadd.f32 %v903, 1e-05
        %v968 = vadd.f32 %v904, 1e-05
        %v969 = vrsqrt.pop %v905
        %v970 = vrsqrt.pop %v906
        %v971 = vrsqrt.pop %v907
        %v972 = vrsqrt.pop %v908
        %v973 = vrsqrt.pop %v909
        %v974 = vrsqrt.pop %v910
        %v975 = vrsqrt.pop %v911
        %v976 = vrsqrt.pop %v912
        %v977 = vrsqrt.pop %v913
        %v978 = vrsqrt.pop %v914
        %v979 = vrsqrt.pop %v915
        %v980 = vrsqrt.pop %v916
        %v981 = vrsqrt.pop %v917
        %v982 = vrsqrt.pop %v918
        %v983 = vrsqrt.pop %v919
        %v984 = vrsqrt.pop %v920
        %v985 = vrsqrt.pop %v921
        %v986 = vrsqrt.pop %v922
        %v987 = vrsqrt.pop %v923
        %v988 = vrsqrt.pop %v924
        %v989 = vrsqrt.pop %v925
        %v990 = vrsqrt.pop %v926
        %v991 = vrsqrt.pop %v927
        %v992 = vrsqrt.pop %v928
        %v993 = vrsqrt.pop %v929
        %v994 = vrsqrt.pop %v930
        %v995 = vrsqrt.pop %v931
        %v996 = vrsqrt.pop %v932
        %v997 = vrsqrt.pop %v933
        %v998 = vrsqrt.pop %v934
        %v999 = vrsqrt.pop %v935
        %v1000 = vrsqrt.pop %v936
        %v1001 = vrsqrt.pop %v937
        %v1002 = vrsqrt.pop %v938
        %v1003 = vrsqrt.pop %v939
        %v1004 = vrsqrt.pop %v940
        %v1005 = vrsqrt.pop %v941
        %v1006 = vrsqrt.pop %v942
        %v1007 = vrsqrt.pop %v943
        %v1008 = vrsqrt.pop %v944
        %v1009 = vrsqrt.pop %v945
        %v1010 = vrsqrt.pop %v946
        %v1011 = vrsqrt.pop %v947
        %v1012 = vrsqrt.pop %v948
        %v1013 = vrsqrt.pop %v949
        %v1014 = vrsqrt.pop %v950
        %v1015 = vrsqrt.pop %v951
        %v1016 = vrsqrt.pop %v952
        %v1017 = vrsqrt.pop %v953
        %v1018 = vrsqrt.pop %v954
        %v1019 = vrsqrt.pop %v955
        %v1020 = vrsqrt.pop %v956
        %v1021 = vrsqrt.pop %v957
        %v1022 = vrsqrt.pop %v958
        %v1023 = vrsqrt.pop %v959
        %v1024 = vrsqrt.pop %v960
        %v1025 = vrsqrt.pop %v961
        %v1026 = vrsqrt.pop %v962
        %v1027 = vrsqrt.pop %v963
        %v1028 = vrsqrt.pop %v964
        %v1029 = vrsqrt.pop %v965
        %v1030 = vrsqrt.pop %v966
        %v1031 = vrsqrt.pop %v967
        %v1032 = vrsqrt.pop %v968
        %v1033 = vmul.f32 %v585, %v969
        %v1034 = vmul.f32 %v586, %v970
        %v1035 = vmul.f32 %v587, %v971
        %v1036 = vmul.f32 %v588, %v972
        %v1037 = vmul.f32 %v589, %v973
        %v1038 = vmul.f32 %v590, %v974
        %v1039 = vmul.f32 %v591, %v975
        %v1040 = vmul.f32 %v592, %v976
        %v1041 = vmul.f32 %v593, %v977
        %v1042 = vmul.f32 %v594, %v978
        %v1043 = vmul.f32 %v595, %v979
        %v1044 = vmul.f32 %v596, %v980
        %v1045 = vmul.f32 %v597, %v981
        %v1046 = vmul.f32 %v598, %v982
        %v1047 = vmul.f32 %v599, %v983
        %v1048 = vmul.f32 %v600, %v984
        %v1049 = vmul.f32 %v601, %v985
        %v1050 = vmul.f32 %v602, %v986
        %v1051 = vmul.f32 %v603, %v987
        %v1052 = vmul.f32 %v604, %v988
        %v1053 = vmul.f32 %v605, %v989
        %v1054 = vmul.f32 %v606, %v990
        %v1055 = vmul.f32 %v607, %v991
        %v1056 = vmul.f32 %v608, %v992
        %v1057 = vmul.f32 %v609, %v993
        %v1058 = vmul.f32 %v610, %v994
        %v1059 = vmul.f32 %v611, %v995
        %v1060 = vmul.f32 %v612, %v996
        %v1061 = vmul.f32 %v613, %v997
        %v1062 = vmul.f32 %v614, %v998
        %v1063 = vmul.f32 %v615, %v999
        %v1064 = vmul.f32 %v616, %v1000
        %v1065 = vmul.f32 %v617, %v1001
        %v1066 = vmul.f32 %v618, %v1002
        %v1067 = vmul.f32 %v619, %v1003
        %v1068 = vmul.f32 %v620, %v1004
        %v1069 = vmul.f32 %v621, %v1005
        %v1070 = vmul.f32 %v622, %v1006
        %v1071 = vmul.f32 %v623, %v1007
        %v1072 = vmul.f32 %v624, %v1008
        %v1073 = vmul.f32 %v625, %v1009
        %v1074 = vmul.f32 %v626, %v1010
        %v1075 = vmul.f32 %v627, %v1011
        %v1076 = vmul.f32 %v628, %v1012
        %v1077 = vmul.f32 %v629, %v1013
        %v1078 = vmul.f32 %v630, %v1014
        %v1079 = vmul.f32 %v631, %v1015
        %v1080 = vmul.f32 %v632, %v1016
        %v1081 = vmul.f32 %v633, %v1017
        %v1082 = vmul.f32 %v634, %v1018
        %v1083 = vmul.f32 %v635, %v1019
        %v1084 = vmul.f32 %v636, %v1020
        %v1085 = vmul.f32 %v637, %v1021
        %v1086 = vmul.f32 %v638, %v1022
        %v1087 = vmul.f32 %v639, %v1023
        %v1088 = vmul.f32 %v640, %v1024
        %v1089 = vmul.f32 %v641, %v1025
        %v1090 = vmul.f32 %v642, %v1026
        %v1091 = vmul.f32 %v643, %v1027
        %v1092 = vmul.f32 %v644, %v1028
        %v1093 = vmul.f32 %v645, %v1029
        %v1094 = vmul.f32 %v646, %v1030
        %v1095 = vmul.f32 %v647, %v1031
        %v1096 = vmul.f32 %v648, %v1032
        %v1098 = vlaneseq
        %v1099 = vshrl.u32 %v1098, 7
        %v1100 = vsub.s32 0, %v1099
        %v1101 = vrot.slane %v326, %v1100
        %v1103 = vmul.f32 %v1033, %v1101
        %v1104 = vmul.f32 %v1034, %v1101
        %v1105 = vmul.f32 %v1035, %v1101
        %v1106 = vmul.f32 %v1036, %v1101
        %v1107 = vmul.f32 %v1037, %v1101
        %v1108 = vmul.f32 %v1038, %v1101
        %v1109 = vmul.f32 %v1039, %v1101
        %v1110 = vmul.f32 %v1040, %v1101
        %v1111 = vmul.f32 %v1041, %v1101
        %v1112 = vmul.f32 %v1042, %v1101
        %v1113 = vmul.f32 %v1043, %v1101
        %v1114 = vmul.f32 %v1044, %v1101
        %v1115 = vmul.f32 %v1045, %v1101
        %v1116 = vmul.f32 %v1046, %v1101
        %v1117 = vmul.f32 %v1047, %v1101
        %v1118 = vmul.f32 %v1048, %v1101
        %v1119 = vmul.f32 %v1049, %v1101
        %v1120 = vmul.f32 %v1050, %v1101
        %v1121 = vmul.f32 %v1051, %v1101
        %v1122 = vmul.f32 %v1052, %v1101
        %v1123 = vmul.f32 %v1053, %v1101
        %v1124 = vmul.f32 %v1054, %v1101
        %v1125 = vmul.f32 %v1055, %v1101
        %v1126 = vmul.f32 %v1056, %v1101
        %v1127 = vmul.f32 %v1057, %v1101
        %v1128 = vmul.f32 %v1058, %v1101
        %v1129 = vmul.f32 %v1059, %v1101
        %v1130 = vmul.f32 %v1060, %v1101
        %v1131 = vmul.f32 %v1061, %v1101
        %v1132 = vmul.f32 %v1062, %v1101
        %v1133 = vmul.f32 %v1063, %v1101
        %v1134 = vmul.f32 %v1064, %v1101
        %v1135 = vmul.f32 %v1065, %v1101
        %v1136 = vmul.f32 %v1066, %v1101
        %v1137 = vmul.f32 %v1067, %v1101
        %v1138 = vmul.f32 %v1068, %v1101
        %v1139 = vmul.f32 %v1069, %v1101
        %v1140 = vmul.f32 %v1070, %v1101
        %v1141 = vmul.f32 %v1071, %v1101
        %v1142 = vmul.f32 %v1072, %v1101
        %v1143 = vmul.f32 %v1073, %v1101
        %v1144 = vmul.f32 %v1074, %v1101
        %v1145 = vmul.f32 %v1075, %v1101
        %v1146 = vmul.f32 %v1076, %v1101
        %v1147 = vmul.f32 %v1077, %v1101
        %v1148 = vmul.f32 %v1078, %v1101
        %v1149 = vmul.f32 %v1079, %v1101
        %v1150 = vmul.f32 %v1080, %v1101
        %v1151 = vmul.f32 %v1081, %v1101
        %v1152 = vmul.f32 %v1082, %v1101
        %v1153 = vmul.f32 %v1083, %v1101
        %v1154 = vmul.f32 %v1084, %v1101
        %v1155 = vmul.f32 %v1085, %v1101
        %v1156 = vmul.f32 %v1086, %v1101
        %v1157 = vmul.f32 %v1087, %v1101
        %v1158 = vmul.f32 %v1088, %v1101
        %v1159 = vmul.f32 %v1089, %v1101
        %v1160 = vmul.f32 %v1090, %v1101
        %v1161 = vmul.f32 %v1091, %v1101
        %v1162 = vmul.f32 %v1092, %v1101
        %v1163 = vmul.f32 %v1093, %v1101
        %v1164 = vmul.f32 %v1094, %v1101
        %v1165 = vmul.f32 %v1095, %v1101
        %v1166 = vmul.f32 %v1096, %v1101
        %v1168 = vlaneseq
        %v1169 = vshrl.u32 %v1168, 7
        %v1170 = vsub.s32 0, %v1169
        %v1171 = vrot.slane %v327, %v1170
        %v1173 = vadd.f32 %v1103, %v1171
        %v1174 = vadd.f32 %v1104, %v1171
        %v1175 = vadd.f32 %v1105, %v1171
        %v1176 = vadd.f32 %v1106, %v1171
        %v1177 = vadd.f32 %v1107, %v1171
        %v1178 = vadd.f32 %v1108, %v1171
        %v1179 = vadd.f32 %v1109, %v1171
        %v1180 = vadd.f32 %v1110, %v1171
        %v1181 = vadd.f32 %v1111, %v1171
        %v1182 = vadd.f32 %v1112, %v1171
        %v1183 = vadd.f32 %v1113, %v1171
        %v1184 = vadd.f32 %v1114, %v1171
        %v1185 = vadd.f32 %v1115, %v1171
        %v1186 = vadd.f32 %v1116, %v1171
        %v1187 = vadd.f32 %v1117, %v1171
        %v1188 = vadd.f32 %v1118, %v1171
        %v1189 = vadd.f32 %v1119, %v1171
        %v1190 = vadd.f32 %v1120, %v1171
        %v1191 = vadd.f32 %v1121, %v1171
        %v1192 = vadd.f32 %v1122, %v1171
        %v1193 = vadd.f32 %v1123, %v1171
        %v1194 = vadd.f32 %v1124, %v1171
        %v1195 = vadd.f32 %v1125, %v1171
        %v1196 = vadd.f32 %v1126, %v1171
        %v1197 = vadd.f32 %v1127, %v1171
        %v1198 = vadd.f32 %v1128, %v1171
        %v1199 = vadd.f32 %v1129, %v1171
        %v1200 = vadd.f32 %v1130, %v1171
        %v1201 = vadd.f32 %v1131, %v1171
        %v1202 = vadd.f32 %v1132, %v1171
        %v1203 = vadd.f32 %v1133, %v1171
        %v1204 = vadd.f32 %v1134, %v1171
        %v1205 = vadd.f32 %v1135, %v1171
        %v1206 = vadd.f32 %v1136, %v1171
        %v1207 = vadd.f32 %v1137, %v1171
        %v1208 = vadd.f32 %v1138, %v1171
        %v1209 = vadd.f32 %v1139, %v1171
        %v1210 = vadd.f32 %v1140, %v1171
        %v1211 = vadd.f32 %v1141, %v1171
        %v1212 = vadd.f32 %v1142, %v1171
        %v1213 = vadd.f32 %v1143, %v1171
        %v1214 = vadd.f32 %v1144, %v1171
        %v1215 = vadd.f32 %v1145, %v1171
        %v1216 = vadd.f32 %v1146, %v1171
        %v1217 = vadd.f32 %v1147, %v1171
        %v1218 = vadd.f32 %v1148, %v1171
        %v1219 = vadd.f32 %v1149, %v1171
        %v1220 = vadd.f32 %v1150, %v1171
        %v1221 = vadd.f32 %v1151, %v1171
        %v1222 = vadd.f32 %v1152, %v1171
        %v1223 = vadd.f32 %v1153, %v1171
        %v1224 = vadd.f32 %v1154, %v1171
        %v1225 = vadd.f32 %v1155, %v1171
        %v1226 = vadd.f32 %v1156, %v1171
        %v1227 = vadd.f32 %v1157, %v1171
        %v1228 = vadd.f32 %v1158, %v1171
        %v1229 = vadd.f32 %v1159, %v1171
        %v1230 = vadd.f32 %v1160, %v1171
        %v1231 = vadd.f32 %v1161, %v1171
        %v1232 = vadd.f32 %v1162, %v1171
        %v1233 = vadd.f32 %v1163, %v1171
        %v1234 = vadd.f32 %v1164, %v1171
        %v1235 = vadd.f32 %v1165, %v1171
        %v1236 = vadd.f32 %v1166, %v1171
        %1237 = vst [vmem:[%s300] sm:$0xff] %v1173
        %1238 = vst [vmem:[%s300 + $0x8] sm:$0xff] %v1174
        %1239 = vst [vmem:[%s300 + $0x10] sm:$0xff] %v1175
        %1240 = vst [vmem:[%s300 + $0x18] sm:$0xff] %v1176
        %1241 = vst [vmem:[%s300 + $0x20] sm:$0xff] %v1177
        %1242 = vst [vmem:[%s300 + $0x28] sm:$0xff] %v1178
        %1243 = vst [vmem:[%s300 + $0x30] sm:$0xff] %v1179
        %1244 = vst [vmem:[%s300 + $0x38] sm:$0xff] %v1180
        %1245 = vst [vmem:[%s300 + $0x40] sm:$0xff] %v1181
        %1246 = vst [vmem:[%s300 + $0x48] sm:$0xff] %v1182
        %1247 = vst [vmem:[%s300 + $0x50] sm:$0xff] %v1183
        %1248 = vst [vmem:[%s300 + $0x58] sm:$0xff] %v1184
        %1249 = vst [vmem:[%s300 + $0x60] sm:$0xff] %v1185
        %1250 = vst [vmem:[%s300 + $0x68] sm:$0xff] %v1186
        %1251 = vst [vmem:[%s300 + $0x70] sm:$0xff] %v1187
        %1252 = vst [vmem:[%s300 + $0x78] sm:$0xff] %v1188
        %1253 = vst [vmem:[%s300 + $0x80] sm:$0xff] %v1189
        %1254 = vst [vmem:[%s300 + $0x88] sm:$0xff] %v1190
        %1255 = vst [vmem:[%s300 + $0x90] sm:$0xff] %v1191
        %1256 = vst [vmem:[%s300 + $0x98] sm:$0xff] %v1192
        %1257 = vst [vmem:[%s300 + $0xa0] sm:$0xff] %v1193
        %1258 = vst [vmem:[%s300 + $0xa8] sm:$0xff] %v1194
        %1259 = vst [vmem:[%s300 + $0xb0] sm:$0xff] %v1195
        %1260 = vst [vmem:[%s300 + $0xb8] sm:$0xff] %v1196
        %1261 = vst [vmem:[%s300 + $0xc0] sm:$0xff] %v1197
        %1262 = vst [vmem:[%s300 + $0xc8] sm:$0xff] %v1198
        %1263 = vst [vmem:[%s300 + $0xd0] sm:$0xff] %v1199
        %1264 = vst [vmem:[%s300 + $0xd8] sm:$0xff] %v1200
        %1265 = vst [vmem:[%s300 + $0xe0] sm:$0xff] %v1201
        %1266 = vst [vmem:[%s300 + $0xe8] sm:$0xff] %v1202
        %1267 = vst [vmem:[%s300 + $0xf0] sm:$0xff] %v1203
        %1268 = vst [vmem:[%s300 + $0xf8] sm:$0xff] %v1204
        %1269 = vst [vmem:[%s300 + $0x100] sm:$0xff] %v1205
        %1270 = vst [vmem:[%s300 + $0x108] sm:$0xff] %v1206
        %1271 = vst [vmem:[%s300 + $0x110] sm:$0xff] %v1207
        %1272 = vst [vmem:[%s300 + $0x118] sm:$0xff] %v1208
        %1273 = vst [vmem:[%s300 + $0x120] sm:$0xff] %v1209
        %1274 = vst [vmem:[%s300 + $0x128] sm:$0xff] %v1210
        %1275 = vst [vmem:[%s300 + $0x130] sm:$0xff] %v1211
        %1276 = vst [vmem:[%s300 + $0x138] sm:$0xff] %v1212
        %1277 = vst [vmem:[%s300 + $0x140] sm:$0xff] %v1213
        %1278 = vst [vmem:[%s300 + $0x148] sm:$0xff] %v1214
        %1279 = vst [vmem:[%s300 + $0x150] sm:$0xff] %v1215
        %1280 = vst [vmem:[%s300 + $0x158] sm:$0xff] %v1216
        %1281 = vst [vmem:[%s300 + $0x160] sm:$0xff] %v1217
        %1282 = vst [vmem:[%s300 + $0x168] sm:$0xff] %v1218
        %1283 = vst [vmem:[%s300 + $0x170] sm:$0xff] %v1219
        %1284 = vst [vmem:[%s300 + $0x178] sm:$0xff] %v1220
        %1285 = vst [vmem:[%s300 + $0x180] sm:$0xff] %v1221
        %1286 = vst [vmem:[%s300 + $0x188] sm:$0xff] %v1222
        %1287 = vst [vmem:[%s300 + $0x190] sm:$0xff] %v1223
        %1288 = vst [vmem:[%s300 + $0x198] sm:$0xff] %v1224
        %1289 = vst [vmem:[%s300 + $0x1a0] sm:$0xff] %v1225
        %1290 = vst [vmem:[%s300 + $0x1a8] sm:$0xff] %v1226
        %1291 = vst [vmem:[%s300 + $0x1b0] sm:$0xff] %v1227
        %1292 = vst [vmem:[%s300 + $0x1b8] sm:$0xff] %v1228
        %1293 = vst [vmem:[%s300 + $0x1c0] sm:$0xff] %v1229
        %1294 = vst [vmem:[%s300 + $0x1c8] sm:$0xff] %v1230
        %1295 = vst [vmem:[%s300 + $0x1d0] sm:$0xff] %v1231
        %1296 = vst [vmem:[%s300 + $0x1d8] sm:$0xff] %v1232
        %1297 = vst [vmem:[%s300 + $0x1e0] sm:$0xff] %v1233
        %1298 = vst [vmem:[%s300 + $0x1e8] sm:$0xff] %v1234
        %1299 = vst [vmem:[%s300 + $0x1f0] sm:$0xff] %v1235
        %1300 = vst [vmem:[%s300 + $0x1f8] sm:$0xff] %v1236
        %v1301 = vld [vmem:[%s278] ss:$4 sm:$0xff]
        %s1302 = scalar_lea.vmem %s278, 32 [#allocation4]
        %v1303 = vld [vmem:[%s1302] ss:$4 sm:$0xff]
        %s1304 = scalar_lea.vmem %s278, 64 [#allocation4]
        %v1305 = vld [vmem:[%s1304] ss:$4 sm:$0xff]
        %s1306 = scalar_lea.vmem %s278, 96 [#allocation4]
        %v1307 = vld [vmem:[%s1306] ss:$4 sm:$0xff]
        %s1308 = scalar_lea.vmem %s278, 128 [#allocation4]
        %v1309 = vld [vmem:[%s1308] ss:$4 sm:$0xff]
        %s1310 = scalar_lea.vmem %s278, 160 [#allocation4]
        %v1311 = vld [vmem:[%s1310] ss:$4 sm:$0xff]
        %s1312 = scalar_lea.vmem %s278, 192 [#allocation4]
        %v1313 = vld [vmem:[%s1312] ss:$4 sm:$0xff]
        %s1314 = scalar_lea.vmem %s278, 224 [#allocation4]
        %v1315 = vld [vmem:[%s1314] ss:$4 sm:$0xff]
        %s1316 = scalar_lea.vmem %s278, 256 [#allocation4]
        %v1317 = vld [vmem:[%s1316] ss:$4 sm:$0xff]
        %s1318 = scalar_lea.vmem %s278, 288 [#allocation4]
        %v1319 = vld [vmem:[%s1318] ss:$4 sm:$0xff]
        %s1320 = scalar_lea.vmem %s278, 320 [#allocation4]
        %v1321 = vld [vmem:[%s1320] ss:$4 sm:$0xff]
        %s1322 = scalar_lea.vmem %s278, 352 [#allocation4]
        %v1323 = vld [vmem:[%s1322] ss:$4 sm:$0xff]
        %s1324 = scalar_lea.vmem %s278, 384 [#allocation4]
        %v1325 = vld [vmem:[%s1324] ss:$4 sm:$0xff]
        %s1326 = scalar_lea.vmem %s278, 416 [#allocation4]
        %v1327 = vld [vmem:[%s1326] ss:$4 sm:$0xff]
        %s1328 = scalar_lea.vmem %s278, 448 [#allocation4]
        %v1329 = vld [vmem:[%s1328] ss:$4 sm:$0xff]
        %s1330 = scalar_lea.vmem %s278, 480 [#allocation4]
        %v1331 = vld [vmem:[%s1330] ss:$4 sm:$0xff]
        %s1332 = scalar_lea.vmem %s278, 1 [#allocation4]
        %v1333 = vld [vmem:[%s1332] ss:$4 sm:$0xff]
        %s1334 = scalar_lea.vmem %s278, 33 [#allocation4]
        %v1335 = vld [vmem:[%s1334] ss:$4 sm:$0xff]
        %s1336 = scalar_lea.vmem %s278, 65 [#allocation4]
        %v1337 = vld [vmem:[%s1336] ss:$4 sm:$0xff]
        %s1338 = scalar_lea.vmem %s278, 97 [#allocation4]
        %v1339 = vld [vmem:[%s1338] ss:$4 sm:$0xff]
        %s1340 = scalar_lea.vmem %s278, 129 [#allocation4]
        %v1341 = vld [vmem:[%s1340] ss:$4 sm:$0xff]
        %s1342 = scalar_lea.vmem %s278, 161 [#allocation4]
        %v1343 = vld [vmem:[%s1342] ss:$4 sm:$0xff]
        %s1344 = scalar_lea.vmem %s278, 193 [#allocation4]
        %v1345 = vld [vmem:[%s1344] ss:$4 sm:$0xff]
        %s1346 = scalar_lea.vmem %s278, 225 [#allocation4]
        %v1347 = vld [vmem:[%s1346] ss:$4 sm:$0xff]
        %s1348 = scalar_lea.vmem %s278, 257 [#allocation4]
        %v1349 = vld [vmem:[%s1348] ss:$4 sm:$0xff]
        %s1350 = scalar_lea.vmem %s278, 289 [#allocation4]
        %v1351 = vld [vmem:[%s1350] ss:$4 sm:$0xff]
        %s1352 = scalar_lea.vmem %s278, 321 [#allocation4]
        %v1353 = vld [vmem:[%s1352] ss:$4 sm:$0xff]
        %s1354 = scalar_lea.vmem %s278, 353 [#allocation4]
        %v1355 = vld [vmem:[%s1354] ss:$4 sm:$0xff]
        %s1356 = scalar_lea.vmem %s278, 385 [#allocation4]
        %v1357 = vld [vmem:[%s1356] ss:$4 sm:$0xff]
        %s1358 = scalar_lea.vmem %s278, 417 [#allocation4]
        %v1359 = vld [vmem:[%s1358] ss:$4 sm:$0xff]
        %s1360 = scalar_lea.vmem %s278, 449 [#allocation4]
        %v1361 = vld [vmem:[%s1360] ss:$4 sm:$0xff]
        %s1362 = scalar_lea.vmem %s278, 481 [#allocation4]
        %v1363 = vld [vmem:[%s1362] ss:$4 sm:$0xff]
        %s1364 = scalar_lea.vmem %s278, 2 [#allocation4]
        %v1365 = vld [vmem:[%s1364] ss:$4 sm:$0xff]
        %s1366 = scalar_lea.vmem %s278, 34 [#allocation4]
        %v1367 = vld [vmem:[%s1366] ss:$4 sm:$0xff]
        %s1368 = scalar_lea.vmem %s278, 66 [#allocation4]
        %v1369 = vld [vmem:[%s1368] ss:$4 sm:$0xff]
        %s1370 = scalar_lea.vmem %s278, 98 [#allocation4]
        %v1371 = vld [vmem:[%s1370] ss:$4 sm:$0xff]
        %s1372 = scalar_lea.vmem %s278, 130 [#allocation4]
        %v1373 = vld [vmem:[%s1372] ss:$4 sm:$0xff]
        %s1374 = scalar_lea.vmem %s278, 162 [#allocation4]
        %v1375 = vld [vmem:[%s1374] ss:$4 sm:$0xff]
        %s1376 = scalar_lea.vmem %s278, 194 [#allocation4]
        %v1377 = vld [vmem:[%s1376] ss:$4 sm:$0xff]
        %s1378 = scalar_lea.vmem %s278, 226 [#allocation4]
        %v1379 = vld [vmem:[%s1378] ss:$4 sm:$0xff]
        %s1380 = scalar_lea.vmem %s278, 258 [#allocation4]
        %v1381 = vld [vmem:[%s1380] ss:$4 sm:$0xff]
        %s1382 = scalar_lea.vmem %s278, 290 [#allocation4]
        %v1383 = vld [vmem:[%s1382] ss:$4 sm:$0xff]
        %s1384 = scalar_lea.vmem %s278, 322 [#allocation4]
        %v1385 = vld [vmem:[%s1384] ss:$4 sm:$0xff]
        %s1386 = scalar_lea.vmem %s278, 354 [#allocation4]
        %v1387 = vld [vmem:[%s1386] ss:$4 sm:$0xff]
        %s1388 = scalar_lea.vmem %s278, 386 [#allocation4]
        %v1389 = vld [vmem:[%s1388] ss:$4 sm:$0xff]
        %s1390 = scalar_lea.vmem %s278, 418 [#allocation4]
        %v1391 = vld [vmem:[%s1390] ss:$4 sm:$0xff]
        %s1392 = scalar_lea.vmem %s278, 450 [#allocation4]
        %v1393 = vld [vmem:[%s1392] ss:$4 sm:$0xff]
        %s1394 = scalar_lea.vmem %s278, 482 [#allocation4]
        %v1395 = vld [vmem:[%s1394] ss:$4 sm:$0xff]
        %s1396 = scalar_lea.vmem %s278, 3 [#allocation4]
        %v1397 = vld [vmem:[%s1396] ss:$4 sm:$0xff]
        %s1398 = scalar_lea.vmem %s278, 35 [#allocation4]
        %v1399 = vld [vmem:[%s1398] ss:$4 sm:$0xff]
        %s1400 = scalar_lea.vmem %s278, 67 [#allocation4]
        %v1401 = vld [vmem:[%s1400] ss:$4 sm:$0xff]
        %s1402 = scalar_lea.vmem %s278, 99 [#allocation4]
        %v1403 = vld [vmem:[%s1402] ss:$4 sm:$0xff]
        %s1404 = scalar_lea.vmem %s278, 131 [#allocation4]
        %v1405 = vld [vmem:[%s1404] ss:$4 sm:$0xff]
        %s1406 = scalar_lea.vmem %s278, 163 [#allocation4]
        %v1407 = vld [vmem:[%s1406] ss:$4 sm:$0xff]
        %s1408 = scalar_lea.vmem %s278, 195 [#allocation4]
        %v1409 = vld [vmem:[%s1408] ss:$4 sm:$0xff]
        %s1410 = scalar_lea.vmem %s278, 227 [#allocation4]
        %v1411 = vld [vmem:[%s1410] ss:$4 sm:$0xff]
        %s1412 = scalar_lea.vmem %s278, 259 [#allocation4]
        %v1413 = vld [vmem:[%s1412] ss:$4 sm:$0xff]
        %s1414 = scalar_lea.vmem %s278, 291 [#allocation4]
        %v1415 = vld [vmem:[%s1414] ss:$4 sm:$0xff]
        %s1416 = scalar_lea.vmem %s278, 323 [#allocation4]
        %v1417 = vld [vmem:[%s1416] ss:$4 sm:$0xff]
        %s1418 = scalar_lea.vmem %s278, 355 [#allocation4]
        %v1419 = vld [vmem:[%s1418] ss:$4 sm:$0xff]
        %s1420 = scalar_lea.vmem %s278, 387 [#allocation4]
        %v1421 = vld [vmem:[%s1420] ss:$4 sm:$0xff]
        %s1422 = scalar_lea.vmem %s278, 419 [#allocation4]
        %v1423 = vld [vmem:[%s1422] ss:$4 sm:$0xff]
        %s1424 = scalar_lea.vmem %s278, 451 [#allocation4]
        %v1425 = vld [vmem:[%s1424] ss:$4 sm:$0xff]
        %s1426 = scalar_lea.vmem %s278, 483 [#allocation4]
        %v1427 = vld [vmem:[%s1426] ss:$4 sm:$0xff]
        %v1428 = vmax.f32 %v1301, %v1333
        %v1429 = vmax.f32 %v1303, %v1335
        %v1430 = vmax.f32 %v1305, %v1337
        %v1431 = vmax.f32 %v1307, %v1339
        %v1432 = vmax.f32 %v1309, %v1341
        %v1433 = vmax.f32 %v1311, %v1343
        %v1434 = vmax.f32 %v1313, %v1345
        %v1435 = vmax.f32 %v1315, %v1347
        %v1436 = vmax.f32 %v1317, %v1349
        %v1437 = vmax.f32 %v1319, %v1351
        %v1438 = vmax.f32 %v1321, %v1353
        %v1439 = vmax.f32 %v1323, %v1355
        %v1440 = vmax.f32 %v1325, %v1357
        %v1441 = vmax.f32 %v1327, %v1359
        %v1442 = vmax.f32 %v1329, %v1361
        %v1443 = vmax.f32 %v1331, %v1363
        %v1444 = vmax.f32 %v1365, %v1397
        %v1445 = vmax.f32 %v1367, %v1399
        %v1446 = vmax.f32 %v1369, %v1401
        %v1447 = vmax.f32 %v1371, %v1403
        %v1448 = vmax.f32 %v1373, %v1405
        %v1449 = vmax.f32 %v1375, %v1407
        %v1450 = vmax.f32 %v1377, %v1409
        %v1451 = vmax.f32 %v1379, %v1411
        %v1452 = vmax.f32 %v1381, %v1413
        %v1453 = vmax.f32 %v1383, %v1415
        %v1454 = vmax.f32 %v1385, %v1417
        %v1455 = vmax.f32 %v1387, %v1419
        %v1456 = vmax.f32 %v1389, %v1421
        %v1457 = vmax.f32 %v1391, %v1423
        %v1458 = vmax.f32 %v1393, %v1425
        %v1459 = vmax.f32 %v1395, %v1427
        %v1460 = vmax.f32 %v1428, %v1444
        %v1461 = vmax.f32 %v1429, %v1445
        %v1462 = vmax.f32 %v1430, %v1446
        %v1463 = vmax.f32 %v1431, %v1447
        %v1464 = vmax.f32 %v1432, %v1448
        %v1465 = vmax.f32 %v1433, %v1449
        %v1466 = vmax.f32 %v1434, %v1450
        %v1467 = vmax.f32 %v1435, %v1451
        %v1468 = vmax.f32 %v1436, %v1452
        %v1469 = vmax.f32 %v1437, %v1453
        %v1470 = vmax.f32 %v1438, %v1454
        %v1471 = vmax.f32 %v1439, %v1455
        %v1472 = vmax.f32 %v1440, %v1456
        %v1473 = vmax.f32 %v1441, %v1457
        %v1474 = vmax.f32 %v1442, %v1458
        %v1475 = vmax.f32 %v1443, %v1459
        %1476 = vst [vmem:[#allocation2] sm:$0xff] %v1460
        %1477 = vst [vmem:[#allocation2 + $0x8] sm:$0xff] %v1461
        %1478 = vst [vmem:[#allocation2 + $0x10] sm:$0xff] %v1462
        %1479 = vst [vmem:[#allocation2 + $0x18] sm:$0xff] %v1463
        %1480 = vst [vmem:[#allocation2 + $0x20] sm:$0xff] %v1464
        %1481 = vst [vmem:[#allocation2 + $0x28] sm:$0xff] %v1465
        %1482 = vst [vmem:[#allocation2 + $0x30] sm:$0xff] %v1466
        %1483 = vst [vmem:[#allocation2 + $0x38] sm:$0xff] %v1467
        %1484 = vst [vmem:[#allocation2 + $0x40] sm:$0xff] %v1468
        %1485 = vst [vmem:[#allocation2 + $0x48] sm:$0xff] %v1469
        %1486 = vst [vmem:[#allocation2 + $0x50] sm:$0xff] %v1470
        %1487 = vst [vmem:[#allocation2 + $0x58] sm:$0xff] %v1471
        %1488 = vst [vmem:[#allocation2 + $0x60] sm:$0xff] %v1472
        %1489 = vst [vmem:[#allocation2 + $0x68] sm:$0xff] %v1473
        %1490 = vst [vmem:[#allocation2 + $0x70] sm:$0xff] %v1474
        %1491 = vst [vmem:[#allocation2 + $0x78] sm:$0xff] %v1475
        %1492 = vadd.xlane.f32.xlu0 %v1460
        %v1493 = vpop.xlane.xlu0 %1492
        %1494 = vadd.xlane.f32.xlu0 %v1461
        %v1495 = vpop.xlane.xlu0 %1494
        %1496 = vadd.xlane.f32.xlu0 %v1462
        %v1497 = vpop.xlane.xlu0 %1496
        %1498 = vadd.xlane.f32.xlu0 %v1463
        %v1499 = vpop.xlane.xlu0 %1498
        %1500 = vadd.xlane.f32.xlu0 %v1464
        %v1501 = vpop.xlane.xlu0 %1500
        %1502 = vadd.xlane.f32.xlu0 %v1465
        %v1503 = vpop.xlane.xlu0 %1502
        %1504 = vadd.xlane.f32.xlu0 %v1466
        %v1505 = vpop.xlane.xlu0 %1504
        %1506 = vadd.xlane.f32.xlu0 %v1467
        %v1507 = vpop.xlane.xlu0 %1506
        %1508 = vadd.xlane.f32.xlu0 %v1468
        %v1509 = vpop.xlane.xlu0 %1508
        %1510 = vadd.xlane.f32.xlu0 %v1469
        %v1511 = vpop.xlane.xlu0 %1510
        %1512 = vadd.xlane.f32.xlu0 %v1470
        %v1513 = vpop.xlane.xlu0 %1512
        %1514 = vadd.xlane.f32.xlu0 %v1471
        %v1515 = vpop.xlane.xlu0 %1514
        %1516 = vadd.xlane.f32.xlu0 %v1472
        %v1517 = vpop.xlane.xlu0 %1516
        %1518 = vadd.xlane.f32.xlu0 %v1473
        %v1519 = vpop.xlane.xlu0 %1518
        %1520 = vadd.xlane.f32.xlu0 %v1474
        %v1521 = vpop.xlane.xlu0 %1520
        %1522 = vadd.xlane.f32.xlu0 %v1475
        %v1523 = vpop.xlane.xlu0 %1522
        %v1524 = vmul.f32 %v1493, %v520
        %v1525 = vmul.f32 %v1495, %v520
        %v1526 = vmul.f32 %v1497, %v520
        %v1527 = vmul.f32 %v1499, %v520
        %v1528 = vmul.f32 %v1501, %v520
        %v1529 = vmul.f32 %v1503, %v520
        %v1530 = vmul.f32 %v1505, %v520
        %v1531 = vmul.f32 %v1507, %v520
        %v1532 = vmul.f32 %v1509, %v520
        %v1533 = vmul.f32 %v1511, %v520
        %v1534 = vmul.f32 %v1513, %v520
        %v1535 = vmul.f32 %v1515, %v520
        %v1536 = vmul.f32 %v1517, %v520
        %v1537 = vmul.f32 %v1519, %v520
        %v1538 = vmul.f32 %v1521, %v520
        %v1539 = vmul.f32 %v1523, %v520
        %v1540 = vsub.f32 %v1460, %v1524
        %v1541 = vsub.f32 %v1461, %v1525
        %v1542 = vsub.f32 %v1462, %v1526
        %v1543 = vsub.f32 %v1463, %v1527
        %v1544 = vsub.f32 %v1464, %v1528
        %v1545 = vsub.f32 %v1465, %v1529
        %v1546 = vsub.f32 %v1466, %v1530
        %v1547 = vsub.f32 %v1467, %v1531
        %v1548 = vsub.f32 %v1468, %v1532
        %v1549 = vsub.f32 %v1469, %v1533
        %v1550 = vsub.f32 %v1470, %v1534
        %v1551 = vsub.f32 %v1471, %v1535
        %v1552 = vsub.f32 %v1472, %v1536
        %v1553 = vsub.f32 %v1473, %v1537
        %v1554 = vsub.f32 %v1474, %v1538
        %v1555 = vsub.f32 %v1475, %v1539
        %v1556 = vmul.f32 %v1540, %v1540
        %v1557 = vmul.f32 %v1541, %v1541
        %v1558 = vmul.f32 %v1542, %v1542
        %v1559 = vmul.f32 %v1543, %v1543
        %v1560 = vmul.f32 %v1544, %v1544
        %v1561 = vmul.f32 %v1545, %v1545
        %v1562 = vmul.f32 %v1546, %v1546
        %v1563 = vmul.f32 %v1547, %v1547
        %v1564 = vmul.f32 %v1548, %v1548
        %v1565 = vmul.f32 %v1549, %v1549
        %v1566 = vmul.f32 %v1550, %v1550
        %v1567 = vmul.f32 %v1551, %v1551
        %v1568 = vmul.f32 %v1552, %v1552
        %v1569 = vmul.f32 %v1553, %v1553
        %v1570 = vmul.f32 %v1554, %v1554
        %v1571 = vmul.f32 %v1555, %v1555
        %1572 = vadd.xlane.f32.xlu0 %v1556
        %v1573 = vpop.xlane.xlu0 %1572
        %1574 = vadd.xlane.f32.xlu0 %v1557
        %v1575 = vpop.xlane.xlu0 %1574
        %1576 = vadd.xlane.f32.xlu0 %v1558
        %v1577 = vpop.xlane.xlu0 %1576
        %1578 = vadd.xlane.f32.xlu0 %v1559
        %v1579 = vpop.xlane.xlu0 %1578
        %1580 = vadd.xlane.f32.xlu0 %v1560
        %v1581 = vpop.xlane.xlu0 %1580
        %1582 = vadd.xlane.f32.xlu0 %v1561
        %v1583 = vpop.xlane.xlu0 %1582
        %1584 = vadd.xlane.f32.xlu0 %v1562
        %v1585 = vpop.xlane.xlu0 %1584
        %1586 = vadd.xlane.f32.xlu0 %v1563
        %v1587 = vpop.xlane.xlu0 %1586
        %1588 = vadd.xlane.f32.xlu0 %v1564
        %v1589 = vpop.xlane.xlu0 %1588
        %1590 = vadd.xlane.f32.xlu0 %v1565
        %v1591 = vpop.xlane.xlu0 %1590
        %1592 = vadd.xlane.f32.xlu0 %v1566
        %v1593 = vpop.xlane.xlu0 %1592
        %1594 = vadd.xlane.f32.xlu0 %v1567
        %v1595 = vpop.xlane.xlu0 %1594
        %1596 = vadd.xlane.f32.xlu0 %v1568
        %v1597 = vpop.xlane.xlu0 %1596
        %1598 = vadd.xlane.f32.xlu0 %v1569
        %v1599 = vpop.xlane.xlu0 %1598
        %1600 = vadd.xlane.f32.xlu0 %v1570
        %v1601 = vpop.xlane.xlu0 %1600
        %1602 = vadd.xlane.f32.xlu0 %v1571
        %v1603 = vpop.xlane.xlu0 %1602
        %v1604 = vmul.f32 %v1573, %v520
        %v1605 = vmul.f32 %v1575, %v520
        %v1606 = vmul.f32 %v1577, %v520
        %v1607 = vmul.f32 %v1579, %v520
        %v1608 = vmul.f32 %v1581, %v520
        %v1609 = vmul.f32 %v1583, %v520
        %v1610 = vmul.f32 %v1585, %v520
        %v1611 = vmul.f32 %v1587, %v520
        %v1612 = vmul.f32 %v1589, %v520
        %v1613 = vmul.f32 %v1591, %v520
        %v1614 = vmul.f32 %v1593, %v520
        %v1615 = vmul.f32 %v1595, %v520
        %v1616 = vmul.f32 %v1597, %v520
        %v1617 = vmul.f32 %v1599, %v520
        %v1618 = vmul.f32 %v1601, %v520
        %v1619 = vmul.f32 %v1603, %v520
        %v1620 = vadd.f32 %v1604, 1e-05
        %v1621 = vadd.f32 %v1605, 1e-05
        %v1622 = vadd.f32 %v1606, 1e-05
        %v1623 = vadd.f32 %v1607, 1e-05
        %v1624 = vadd.f32 %v1608, 1e-05
        %v1625 = vadd.f32 %v1609, 1e-05
        %v1626 = vadd.f32 %v1610, 1e-05
        %v1627 = vadd.f32 %v1611, 1e-05
        %v1628 = vadd.f32 %v1612, 1e-05
        %v1629 = vadd.f32 %v1613, 1e-05
        %v1630 = vadd.f32 %v1614, 1e-05
        %v1631 = vadd.f32 %v1615, 1e-05
        %v1632 = vadd.f32 %v1616, 1e-05
        %v1633 = vadd.f32 %v1617, 1e-05
        %v1634 = vadd.f32 %v1618, 1e-05
        %v1635 = vadd.f32 %v1619, 1e-05
        %v1636 = vrsqrt.pop %v1620
        %v1637 = vrsqrt.pop %v1621
        %v1638 = vrsqrt.pop %v1622
        %v1639 = vrsqrt.pop %v1623
        %v1640 = vrsqrt.pop %v1624
        %v1641 = vrsqrt.pop %v1625
        %v1642 = vrsqrt.pop %v1626
        %v1643 = vrsqrt.pop %v1627
        %v1644 = vrsqrt.pop %v1628
        %v1645 = vrsqrt.pop %v1629
        %v1646 = vrsqrt.pop %v1630
        %v1647 = vrsqrt.pop %v1631
        %v1648 = vrsqrt.pop %v1632
        %v1649 = vrsqrt.pop %v1633
        %v1650 = vrsqrt.pop %v1634
        %v1651 = vrsqrt.pop %v1635
        %v1652 = vmul.f32 %v1540, %v1636
        %v1653 = vmul.f32 %v1541, %v1637
        %v1654 = vmul.f32 %v1542, %v1638
        %v1655 = vmul.f32 %v1543, %v1639
        %v1656 = vmul.f32 %v1544, %v1640
        %v1657 = vmul.f32 %v1545, %v1641
        %v1658 = vmul.f32 %v1546, %v1642
        %v1659 = vmul.f32 %v1547, %v1643
        %v1660 = vmul.f32 %v1548, %v1644
        %v1661 = vmul.f32 %v1549, %v1645
        %v1662 = vmul.f32 %v1550, %v1646
        %v1663 = vmul.f32 %v1551, %v1647
        %v1664 = vmul.f32 %v1552, %v1648
        %v1665 = vmul.f32 %v1553, %v1649
        %v1666 = vmul.f32 %v1554, %v1650
        %v1667 = vmul.f32 %v1555, %v1651
        %v1668 = vmul.f32 %v1652, %v1101
        %v1669 = vmul.f32 %v1653, %v1101
        %v1670 = vmul.f32 %v1654, %v1101
        %v1671 = vmul.f32 %v1655, %v1101
        %v1672 = vmul.f32 %v1656, %v1101
        %v1673 = vmul.f32 %v1657, %v1101
        %v1674 = vmul.f32 %v1658, %v1101
        %v1675 = vmul.f32 %v1659, %v1101
        %v1676 = vmul.f32 %v1660, %v1101
        %v1677 = vmul.f32 %v1661, %v1101
        %v1678 = vmul.f32 %v1662, %v1101
        %v1679 = vmul.f32 %v1663, %v1101
        %v1680 = vmul.f32 %v1664, %v1101
        %v1681 = vmul.f32 %v1665, %v1101
        %v1682 = vmul.f32 %v1666, %v1101
        %v1683 = vmul.f32 %v1667, %v1101
        %v1684 = vadd.f32 %v1668, %v1171
        %v1685 = vadd.f32 %v1669, %v1171
        %v1686 = vadd.f32 %v1670, %v1171
        %v1687 = vadd.f32 %v1671, %v1171
        %v1688 = vadd.f32 %v1672, %v1171
        %v1689 = vadd.f32 %v1673, %v1171
        %v1690 = vadd.f32 %v1674, %v1171
        %v1691 = vadd.f32 %v1675, %v1171
        %v1692 = vadd.f32 %v1676, %v1171
        %v1693 = vadd.f32 %v1677, %v1171
        %v1694 = vadd.f32 %v1678, %v1171
        %v1695 = vadd.f32 %v1679, %v1171
        %v1696 = vadd.f32 %v1680, %v1171
        %v1697 = vadd.f32 %v1681, %v1171
        %v1698 = vadd.f32 %v1682, %v1171
        %v1699 = vadd.f32 %v1683, %v1171
        %1700 = vst [vmem:[%s307] sm:$0xff] %v1684
        %1701 = vst [vmem:[%s307 + $0x8] sm:$0xff] %v1685
        %1702 = vst [vmem:[%s307 + $0x10] sm:$0xff] %v1686
        %1703 = vst [vmem:[%s307 + $0x18] sm:$0xff] %v1687
        %1704 = vst [vmem:[%s307 + $0x20] sm:$0xff] %v1688
        %1705 = vst [vmem:[%s307 + $0x28] sm:$0xff] %v1689
        %1706 = vst [vmem:[%s307 + $0x30] sm:$0xff] %v1690
        %1707 = vst [vmem:[%s307 + $0x38] sm:$0xff] %v1691
        %1708 = vst [vmem:[%s307 + $0x40] sm:$0xff] %v1692
        %1709 = vst [vmem:[%s307 + $0x48] sm:$0xff] %v1693
        %1710 = vst [vmem:[%s307 + $0x50] sm:$0xff] %v1694
        %1711 = vst [vmem:[%s307 + $0x58] sm:$0xff] %v1695
        %1712 = vst [vmem:[%s307 + $0x60] sm:$0xff] %v1696
        %1713 = vst [vmem:[%s307 + $0x68] sm:$0xff] %v1697
        %1714 = vst [vmem:[%s307 + $0x70] sm:$0xff] %v1698
        %1715 = vst [vmem:[%s307 + $0x78] sm:$0xff] %v1699
        %v1716 = vld [vmem:[#allocation2] ss:$4 sm:$0xff]
        %s1717 = scalar_lea.vmem [#allocation2], 32
        %v1718 = vld [vmem:[%s1717] ss:$4 sm:$0xff]
        %s1719 = scalar_lea.vmem [#allocation2], 64
        %v1720 = vld [vmem:[%s1719] ss:$4 sm:$0xff]
        %s1721 = scalar_lea.vmem [#allocation2], 96
        %v1722 = vld [vmem:[%s1721] ss:$4 sm:$0xff]
        %s1723 = scalar_lea.vmem [#allocation2], 1
        %v1724 = vld [vmem:[%s1723] ss:$4 sm:$0xff]
        %s1725 = scalar_lea.vmem [#allocation2], 33
        %v1726 = vld [vmem:[%s1725] ss:$4 sm:$0xff]
        %s1727 = scalar_lea.vmem [#allocation2], 65
        %v1728 = vld [vmem:[%s1727] ss:$4 sm:$0xff]
        %s1729 = scalar_lea.vmem [#allocation2], 97
        %v1730 = vld [vmem:[%s1729] ss:$4 sm:$0xff]
        %s1731 = scalar_lea.vmem [#allocation2], 2
        %v1732 = vld [vmem:[%s1731] ss:$4 sm:$0xff]
        %s1733 = scalar_lea.vmem [#allocation2], 34
        %v1734 = vld [vmem:[%s1733] ss:$4 sm:$0xff]
        %s1735 = scalar_lea.vmem [#allocation2], 66
        %v1736 = vld [vmem:[%s1735] ss:$4 sm:$0xff]
        %s1737 = scalar_lea.vmem [#allocation2], 98
        %v1738 = vld [vmem:[%s1737] ss:$4 sm:$0xff]
        %s1739 = scalar_lea.vmem [#allocation2], 3
        %v1740 = vld [vmem:[%s1739] ss:$4 sm:$0xff]
        %s1741 = scalar_lea.vmem [#allocation2], 35
        %v1742 = vld [vmem:[%s1741] ss:$4 sm:$0xff]
        %s1743 = scalar_lea.vmem [#allocation2], 67
        %v1744 = vld [vmem:[%s1743] ss:$4 sm:$0xff]
        %s1745 = scalar_lea.vmem [#allocation2], 99
        %v1746 = vld [vmem:[%s1745] ss:$4 sm:$0xff]
        %v1747 = vmax.f32 %v1716, %v1724
        %v1748 = vmax.f32 %v1718, %v1726
        %v1749 = vmax.f32 %v1720, %v1728
        %v1750 = vmax.f32 %v1722, %v1730
        %v1751 = vmax.f32 %v1732, %v1740
        %v1752 = vmax.f32 %v1734, %v1742
        %v1753 = vmax.f32 %v1736, %v1744
        %v1754 = vmax.f32 %v1738, %v1746
        %v1755 = vmax.f32 %v1747, %v1751
        %v1756 = vmax.f32 %v1748, %v1752
        %v1757 = vmax.f32 %v1749, %v1753
        %v1758 = vmax.f32 %v1750, %v1754
        %1759 = vst [vmem:[#allocation3] sm:$0xff] %v1755
        %1760 = vst [vmem:[#allocation3 + $0x8] sm:$0xff] %v1756
        %1761 = vst [vmem:[#allocation3 + $0x10] sm:$0xff] %v1757
        %1762 = vst [vmem:[#allocation3 + $0x18] sm:$0xff] %v1758
        %1763 = vadd.xlane.f32.xlu0 %v1755
        %v1764 = vpop.xlane.xlu0 %1763
        %1765 = vadd.xlane.f32.xlu0 %v1756
        %v1766 = vpop.xlane.xlu0 %1765
        %1767 = vadd.xlane.f32.xlu0 %v1757
        %v1768 = vpop.xlane.xlu0 %1767
        %1769 = vadd.xlane.f32.xlu0 %v1758
        %v1770 = vpop.xlane.xlu0 %1769
        %v1771 = vmul.f32 %v1764, %v520
        %v1772 = vmul.f32 %v1766, %v520
        %v1773 = vmul.f32 %v1768, %v520
        %v1774 = vmul.f32 %v1770, %v520
        %v1775 = vsub.f32 %v1755, %v1771
        %v1776 = vsub.f32 %v1756, %v1772
        %v1777 = vsub.f32 %v1757, %v1773
        %v1778 = vsub.f32 %v1758, %v1774
        %v1779 = vmul.f32 %v1775, %v1775
        %v1780 = vmul.f32 %v1776, %v1776
        %v1781 = vmul.f32 %v1777, %v1777
        %v1782 = vmul.f32 %v1778, %v1778
        %1783 = vadd.xlane.f32.xlu0 %v1779
        %v1784 = vpop.xlane.xlu0 %1783
        %1785 = vadd.xlane.f32.xlu0 %v1780
        %v1786 = vpop.xlane.xlu0 %1785
        %1787 = vadd.xlane.f32.xlu0 %v1781
        %v1788 = vpop.xlane.xlu0 %1787
        %1789 = vadd.xlane.f32.xlu0 %v1782
        %v1790 = vpop.xlane.xlu0 %1789
        %v1791 = vmul.f32 %v1784, %v520
        %v1792 = vmul.f32 %v1786, %v520
        %v1793 = vmul.f32 %v1788, %v520
        %v1794 = vmul.f32 %v1790, %v520
        %v1795 = vadd.f32 %v1791, 1e-05
        %v1796 = vadd.f32 %v1792, 1e-05
        %v1797 = vadd.f32 %v1793, 1e-05
        %v1798 = vadd.f32 %v1794, 1e-05
        %v1799 = vrsqrt.pop %v1795
        %v1800 = vrsqrt.pop %v1796
        %v1801 = vrsqrt.pop %v1797
        %v1802 = vrsqrt.pop %v1798
        %v1803 = vmul.f32 %v1775, %v1799
        %v1804 = vmul.f32 %v1776, %v1800
        %v1805 = vmul.f32 %v1777, %v1801
        %v1806 = vmul.f32 %v1778, %v1802
        %v1807 = vmul.f32 %v1803, %v1101
        %v1808 = vmul.f32 %v1804, %v1101
        %v1809 = vmul.f32 %v1805, %v1101
        %v1810 = vmul.f32 %v1806, %v1101
        %v1811 = vadd.f32 %v1807, %v1171
        %v1812 = vadd.f32 %v1808, %v1171
        %v1813 = vadd.f32 %v1809, %v1171
        %v1814 = vadd.f32 %v1810, %v1171
        %1815 = vst [vmem:[%s314] sm:$0xff] %v1811
        %1816 = vst [vmem:[%s314 + $0x8] sm:$0xff] %v1812
        %1817 = vst [vmem:[%s314 + $0x10] sm:$0xff] %v1813
        %1818 = vst [vmem:[%s314 + $0x18] sm:$0xff] %v1814
        %v1819 = vld [vmem:[#allocation3] ss:$4 sm:$0xff]
        %s1820 = scalar_lea.vmem [#allocation3], 1
        %v1821 = vld [vmem:[%s1820] ss:$4 sm:$0xff]
        %s1822 = scalar_lea.vmem [#allocation3], 2
        %v1823 = vld [vmem:[%s1822] ss:$4 sm:$0xff]
        %s1824 = scalar_lea.vmem [#allocation3], 3
        %v1825 = vld [vmem:[%s1824] ss:$4 sm:$0xff]
        %v1826 = vmax.f32 %v1819, %v1821
        %v1827 = vmax.f32 %v1823, %v1825
        %v1828 = vmax.f32 %v1826, %v1827
        %1829 = vadd.xlane.f32.xlu0 %v1828
        %v1830 = vpop.xlane.xlu0 %1829
        %v1831 = vmul.f32 %v1830, %v520
        %v1832 = vsub.f32 %v1828, %v1831
        %v1833 = vmul.f32 %v1832, %v1832
        %1834 = vadd.xlane.f32.xlu0 %v1833
        %v1835 = vpop.xlane.xlu0 %1834
        %v1836 = vmul.f32 %v1835, %v520
        %v1837 = vadd.f32 %v1836, 1e-05
        %v1838 = vrsqrt.pop %v1837
        %v1839 = vmul.f32 %v1832, %v1838
        %v1840 = vmul.f32 %v1839, %v1101
        %v1841 = vadd.f32 %v1840, %v1171
        %1842 = vst [vmem:[%s321] sm:$0xff] %v1841
        %s1843 = sand.u32 %s122, 1
        %s1844 = scalar_lea.sflag [#allocation6], %s1843
        %s1845 = sand.u32 %s122, 1
        %s1846 = smul.addr %s1845, 512
        %s1847 = scalar_lea.vmem [#allocation7], %s1846
        %s1848 = sand.u32 %s30, 1
        %s1849 = scalar_lea.sflag [#allocation9], %s1848
        %s1850 = sand.u32 %s150, 1
        %s1851 = smul.addr %s1850, 128
        %s1852 = scalar_lea.vmem [#allocation8], %s1851
        %s1853 = sand.u32 %s30, 1
        %s1854 = scalar_lea.sflag [#allocation9], %s1853
        %s1855 = sand.u32 %s178, 1
        %s1856 = smul.addr %s1855, 32
        %s1857 = scalar_lea.vmem [#allocation10], %s1856
        %s1858 = sand.u32 %s206, 1
        %s1859 = scalar_lea.sflag [#allocation12], %s1858
        %s1860 = sand.u32 %s206, 1
        %s1861 = smul.addr %s1860, 8
        %s1862 = scalar_lea.vmem [#allocation11], %s1861
        // Predicated region
        $region37: #{tpu_custom_call.1} parent=31 // pred_check
          %p1863 = pneg %p132
        $region38: #{tpu_custom_call.1} parent=31 // pred_check_branch
          %1865 = sbr.rel (%p1863) target = $region40
        $region39: #{tpu_custom_call.1} parent=31 // pred_region
          %s1866 = smul.u32 64, %s35
          %s1868 = ssub.s32 8192, 8192
          %1869 = vsyncadd %s1844, %s1868
          %s1870 = smul.addr %s34, 128
          %s1871 = sadd.s32 %s1866, %s1870
          %s1872 = smul.addr %s1871, 128
          %s1873 = scalar_lea.hbm %s3, %s1872
          %s1874 = sshll.u32 %s1847, 4
          %s1875 = int_to_ptr.vmem [resolvable:$true] %s1874
          %1880 = dma.vmem_to_hbm [thread:$0]  %s1875, 8192, %s1873, %s1844, 128, 128, 8
        $region40: #{tpu_custom_call.1} parent=31 // pred_fallthru
          _
        // Predicated region
        $region41: #{tpu_custom_call.1} parent=31 // pred_check
          %p1881 = pneg %p160
        $region42: #{tpu_custom_call.1} parent=31 // pred_check_branch
          %1883 = sbr.rel (%p1881) target = $region44
        $region43: #{tpu_custom_call.1} parent=31 // pred_region
          %s1884 = smul.u32 16, %s35
          %s1886 = ssub.s32 2048, 2048
          %1887 = vsyncadd %s1849, %s1886
          %s1888 = smul.addr %s34, 32
          %s1889 = sadd.s32 %s1884, %s1888
          %s1890 = smul.addr %s1889, 128
          %s1891 = scalar_lea.hbm %s4, %s1890
          %s1892 = sshll.u32 %s1852, 4
          %s1893 = int_to_ptr.vmem [resolvable:$true] %s1892
          %1898 = dma.vmem_to_hbm [thread:$0]  %s1893, 2048, %s1891, %s1849, 128, 128, 8
        $region44: #{tpu_custom_call.1} parent=31 // pred_fallthru
          _
        // Predicated region
        $region45: #{tpu_custom_call.1} parent=31 // pred_check
          %p1899 = pneg %p188
        $region46: #{tpu_custom_call.1} parent=31 // pred_check_branch
          %1901 = sbr.rel (%p1899) target = $region48
        $region47: #{tpu_custom_call.1} parent=31 // pred_region
          %s1902 = smul.u32 4, %s35
          %s1904 = ssub.s32 512, 512
          %1905 = vsyncadd %s1854, %s1904
          %s1906 = smul.addr %s34, 8
          %s1907 = sadd.s32 %s1902, %s1906
          %s1908 = smul.addr %s1907, 128
          %s1909 = scalar_lea.hbm %s5, %s1908
          %s1910 = sshll.u32 %s1857, 4
          %s1911 = int_to_ptr.vmem [resolvable:$true] %s1910
          %1916 = dma.vmem_to_hbm [thread:$0]  %s1911, 512, %s1909, %s1854, 128, 128, 8
        $region48: #{tpu_custom_call.1} parent=31 // pred_fallthru
          _
        // Predicated region
        $region49: #{tpu_custom_call.1} parent=31 // pred_check
          %p1917 = pneg %p216
        $region50: #{tpu_custom_call.1} parent=31 // pred_check_branch
          %1919 = sbr.rel (%p1917) target = $region52
        $region51: #{tpu_custom_call.1} parent=31 // pred_region
          %s1921 = ssub.s32 128, 128
          %1922 = vsyncadd %s1859, %s1921
          %s1923 = smul.addr %s34, 2
          %s1924 = sadd.s32 %s35, %s1923
          %s1925 = smul.addr %s1924, 128
          %s1926 = scalar_lea.hbm %s6, %s1925
          %s1928 = sshll.u32 %s1862, 4
          %s1929 = int_to_ptr.vmem [resolvable:$true] %s1928
          %1931 = dma.vmem_to_hbm [thread:$0]  %s1929, 128, %s1926, %s1859
        $region52: #{tpu_custom_call.1} parent=31 // pred_fallthru
          _
      $region32: #{tpu_custom_call.1} parent=5 // pred_fallthru
        _
      %p1932 = scmp.le.s32.totalorder 2, %s25
      // Predicated region
      $region53: #{tpu_custom_call.1} parent=5 // pred_check
        %p1933 = pneg %p1932
      $region54: #{tpu_custom_call.1} parent=5 // pred_check_branch
        %1935 = sbr.rel (%p1933) target = $region56
      $region55: #{tpu_custom_call.1} parent=5 // pred_region
        %s1936 = ssub.s32 %s25, 2
        // Predicated region
        $region57: #{tpu_custom_call.1} parent=55 // pred_check
          %p1937 = pneg %p138
        $region58: #{tpu_custom_call.1} parent=55 // pred_check_branch
          %1939 = sbr.rel (%p1937) target = $region60
        $region59: #{tpu_custom_call.1} parent=55 // pred_region
          %s1940 = sand.u32 %s123, 1
          %s1941 = scalar_lea.sflag [#allocation6], %s1940
          %s1942 = sand.u32 %s123, 1
          %s1943 = smul.addr %s1942, 512
          %s1944 = scalar_lea.vmem [#allocation7], %s1943
          %1945 = dma.done %s1941, 8192
        $region60: #{tpu_custom_call.1} parent=55 // pred_fallthru
          _
        // Predicated region
        $region61: #{tpu_custom_call.1} parent=55 // pred_check
          %p1946 = pneg %p166
        $region62: #{tpu_custom_call.1} parent=55 // pred_check_branch
          %1948 = sbr.rel (%p1946) target = $region64
        $region63: #{tpu_custom_call.1} parent=55 // pred_region
          %s1949 = sand.u32 %s31, 1
          %s1950 = scalar_lea.sflag [#allocation9], %s1949
          %s1951 = sand.u32 %s151, 1
          %s1952 = smul.addr %s1951, 128
          %s1953 = scalar_lea.vmem [#allocation8], %s1952
          %1954 = dma.done %s1950, 2048
        $region64: #{tpu_custom_call.1} parent=55 // pred_fallthru
          _
        // Predicated region
        $region65: #{tpu_custom_call.1} parent=55 // pred_check
          %p1955 = pneg %p194
        $region66: #{tpu_custom_call.1} parent=55 // pred_check_branch
          %1957 = sbr.rel (%p1955) target = $region68
        $region67: #{tpu_custom_call.1} parent=55 // pred_region
          %s1958 = sand.u32 %s31, 1
          %s1959 = scalar_lea.sflag [#allocation9], %s1958
          %s1960 = sand.u32 %s179, 1
          %s1961 = smul.addr %s1960, 32
          %s1962 = scalar_lea.vmem [#allocation10], %s1961
          %1963 = dma.done %s1959, 512
        $region68: #{tpu_custom_call.1} parent=55 // pred_fallthru
          _
        // Predicated region
        $region69: #{tpu_custom_call.1} parent=55 // pred_check
          %p1964 = pneg %p222
        $region70: #{tpu_custom_call.1} parent=55 // pred_check_branch
          %1966 = sbr.rel (%p1964) target = $region72
        $region71: #{tpu_custom_call.1} parent=55 // pred_region
          %s1967 = sand.u32 %s207, 1
          %s1968 = scalar_lea.sflag [#allocation12], %s1967
          %s1969 = sand.u32 %s207, 1
          %s1970 = smul.addr %s1969, 8
          %s1971 = scalar_lea.vmem [#allocation11], %s1970
          %1972 = dma.done %s1968, 128
        $region72: #{tpu_custom_call.1} parent=55 // pred_fallthru
          _
      $region56: #{tpu_custom_call.1} parent=5 // pred_fallthru
        _
    $region6: #{tpu_custom_call.1} parent=1 // loop_footer
      %s29 = sadd.s32 1, %s25
    $region7: #{tpu_custom_call.1} parent=1 // loop_footer_branch
      %24 = sbr.rel target = $region3
    $region8: #{tpu_custom_call.1} parent=1 // loop_exit
      _
    %1973 = vsyncpa [#allocation5], 1
    %s1974 = scalar_lea.sflag [#allocation5], 1
    %1975 = vsyncpa %s1974, 1
    %1976 = vsyncpa [#allocation6], 1
    %s1977 = scalar_lea.sflag [#allocation6], 1
    %1978 = vsyncpa %s1977, 1
    %1979 = vsyncpa [#allocation9], 1
    %s1980 = scalar_lea.sflag [#allocation9], 1
    %1981 = vsyncpa %s1980, 1
    %1982 = vsyncpa [#allocation12], 1
    %s1983 = scalar_lea.sflag [#allocation12], 1
    %1984 = vsyncpa %s1983, 1

</llo_original>
